<compile_context>
chip_gen: v7x
topology: tpu7x:2x2x1
jax: 0.10.0
libtpu: 0.0.40
codegen_flags: <defaults>
</compile_context>

<pallas_src>
import functools
import math

import jax
import jax.numpy as jnp
from jax.experimental import pallas as pl
from jax.experimental.pallas import tpu as pltpu

# ---- small synthetic config (consistent with BertConfig structure) ----
BATCH = 2
SEQ = 8
HIDDEN = 32
NUM_HEADS = 4
D_K = HIDDEN // NUM_HEADS
INTERMEDIATE = 64
NUM_LAYERS = 2
NORM_EPS = 1e-7            # BertConfig.norm_eps
MASK_NEG = -1e9            # finite stand-in for -inf (see header note)
N_VEC = 8                  # number of packed small per-layer vectors


# ---------------- in-kernel math helpers (traced into the kernel) ----------------
def _layer_norm(x, w, b, eps):
    # matches the PyTorch LayerNorm in the module (biased variance, sqrt(var + eps))
    mean = jnp.mean(x, axis=-1, keepdims=True)
    var = jnp.mean((x - mean) ** 2, axis=-1, keepdims=True)
    inv_std = jax.lax.rsqrt(var + eps)
    return w * ((x - mean) * inv_std) + b


def _gelu_exact(x):
    # nn.GELU() default = exact (erf) gelu
    return 0.5 * x * (1.0 + jax.lax.erf(x * (1.0 / math.sqrt(2.0))))


# ---------------- Pallas kernel: full encoder, one grid step per layer ----------------
def bert_encoder_kernel(mask_ref, x_ref,
                        wqkv_ref, wo_ref, w1_ref, w2_ref, vec_ref,
                        out_ref, *, num_heads, eps):
    M, H = x_ref.shape                       # M = B * S (batch folded into matmul M dim)
    B, _, S = mask_ref.shape
    d_k = H // num_heads
    X = num_heads * B                        # row index = head * B + batch
    I = w1_ref.shape[-1]

    layer = pl.program_id(0)

    # Layer 0: seed the resident activation (stays in VMEM across all grid steps, written
    # back to HBM only once at the end since the out block index is constant).
    @pl.when(layer == 0)
    def _():
        out_ref[...] = x_ref[...]

    x = out_ref[...]                         # (M, H) carried activation, float32
    vec = vec_ref[0]                         # (N_VEC, VW) packed small per-layer vectors
    b_qkv = vec[0:1, 0:3 * H]                # (1, 3H)  (q-part pre-scaled by 1/sqrt(d_k))
    b_o   = vec[1:2, 0:H]
    ln1w  = vec[2:3, 0:H]
    ln1b  = vec[3:4, 0:H]
    b_1   = vec[4:5, 0:I]
    b_2   = vec[5:6, 0:H]
    ln2w  = vec[6:7, 0:H]
    ln2b  = vec[7:8, 0:H]

    # ---- QKV projection: ONE full-lane MXU matmul (K=H, N=3H) ----
    qkv = jnp.dot(x, wqkv_ref[0], preferred_element_type=jnp.float32) + b_qkv   # (M, 3H)

    def split_heads(t2d):
        # (M, H) -> (num_heads, M, d_k) via static lane slices, then leading/sublane-only
        # reshape to (X, S, d_k) with row = head*B + batch.
        heads = [t2d[:, n * d_k:(n + 1) * d_k] for n in range(num_heads)]
        return jnp.stack(heads, axis=0).reshape(X, S, d_k)

    q = split_heads(qkv[:, 0 * H:1 * H])     # scale already folded into Wqkv/b_qkv
    k = split_heads(qkv[:, 1 * H:2 * H])
    v = split_heads(qkv[:, 2 * H:3 * H])

    # ---- attention: all (head, batch) pairs in one batched matmul ----
    s = jnp.einsum('xqd,xkd->xqk', q, k, preferred_element_type=jnp.float32)     # (X, S, S)
    # additive mask bias (B,1,S), broadcast over heads/queries with leading-dim reshapes only
    s = (s.reshape(num_heads, B, S, S) + mask_ref[...][None]).reshape(X, S, S)

    m = jnp.max(s, axis=-1, keepdims=True)
    e = jnp.exp(s - m)
    denom = jnp.sum(e, axis=-1, keepdims=True)
    p = e * (1.0 / denom)                    # exact reciprocal on the tiny (X, S, 1) tensor
    ctx = jnp.einsum('xqk,xkd->xqd', p, v, preferred_element_type=jnp.float32)   # (X, S, d_k)

    # ---- output projection: merge heads first, then ONE (M,H)@(H,H) matmul with K=H ----
    ctx = ctx.reshape(num_heads, M, d_k)
    ctx2d = jnp.concatenate([ctx[n] for n in range(num_heads)], axis=-1)          # (M, H)
    y = jnp.dot(ctx2d, wo_ref[0], preferred_element_type=jnp.float32) + b_o

    x1 = _layer_norm(x + y, ln1w, ln1b, eps)

    # ---- feed-forward (plain 2-D MXU matmuls over all B*S tokens) ----
    h = jnp.dot(x1, w1_ref[0], preferred_element_type=jnp.float32) + b_1
    h = _gelu_exact(h)
    ff = jnp.dot(h, w2_ref[0], preferred_element_type=jnp.float32) + b_2
    x2 = _layer_norm(x1 + ff, ln2w, ln2b, eps)

    out_ref[...] = x2.astype(out_ref.dtype)


# ---------------- one-time parameter preparation (hoisted out of the forward path) ----------------
def prepare_encoder_params(layer_params):
    """Stack per-layer weights along a leading layer axis, fold the 1/sqrt(d_k) softmax scale
    into the q projection, and pack the 8 small per-layer vectors into one (L, 8, VW) array.
    Call ONCE at parameter-load time."""
    H, I, DK = HIDDEN, INTERMEDIATE, D_K
    VW = max(3 * H, I, H)
    scale = 1.0 / math.sqrt(DK)
    col_scale = jnp.concatenate(
        [jnp.full((H,), scale, jnp.float32), jnp.ones((2 * H,), jnp.float32)])

    def pad_vec(v):
        v = jnp.asarray(v, jnp.float32).reshape(-1)
        return jnp.pad(v, (0, VW - v.shape[0]))

    wqkv_l, wo_l, w1_l, w2_l, vec_l = [], [], [], [], []
    for p in layer_params:
        wqkv = jnp.asarray(p["wqkv"], jnp.float32) * col_scale[None, :]
        bqkv = jnp.asarray(p["bqkv"], jnp.float32) * col_scale
        wqkv_l.append(wqkv)
        wo_l.append(jnp.asarray(p["wo"], jnp.float32))
        w1_l.append(jnp.asarray(p["w1"], jnp.float32))
        w2_l.append(jnp.asarray(p["w2"], jnp.float32))
        vec_l.append(jnp.stack([
            pad_vec(bqkv), pad_vec(p["bo"]),
            pad_vec(p["ln1w"]), pad_vec(p["ln1b"]),
            pad_vec(p["b1"]), pad_vec(p["b2"]),
            pad_vec(p["ln2w"]), pad_vec(p["ln2b"]),
        ], axis=0))

    return {
        "wqkv": jnp.stack(wqkv_l),   # (L, H, 3H)
        "wo":   jnp.stack(wo_l),     # (L, H, H)
        "w1":   jnp.stack(w1_l),     # (L, H, I)
        "w2":   jnp.stack(w2_l),     # (L, I, H)
        "vecs": jnp.stack(vec_l),    # (L, 8, VW)
    }


# ---------------- forward wrapper: single pallas_call ----------------
@jax.jit
def _bert_encoder_impl(x, mask, packed):
    B, S, H = x.shape
    M = B * S
    L, _, threeH = packed["wqkv"].shape
    I = packed["w1"].shape[-1]
    VW = packed["vecs"].shape[-1]

    # additive mask bias (B, 1, S): 0 where attended, -1e9 where masked
    bias = jnp.where(mask, 0.0, MASK_NEG).astype(jnp.float32).reshape(B, 1, S)
    x2d = x.reshape(M, H).astype(jnp.float32)

    kernel = functools.partial(bert_encoder_kernel, num_heads=NUM_HEADS, eps=NORM_EPS)

    out2d = pl.pallas_call(
        kernel,
        out_shape=jax.ShapeDtypeStruct((M, H), jnp.float32),
        grid=(L,),
        in_specs=[
            pl.BlockSpec((B, 1, S), lambda l: (0, 0, 0)),          # mask bias (fetched once)
            pl.BlockSpec((M, H), lambda l: (0, 0)),                # x (seeds resident act)
            pl.BlockSpec((1, H, threeH), lambda l: (l, 0, 0)),     # Wqkv  (per-layer DMA)
            pl.BlockSpec((1, H, H), lambda l: (l, 0, 0)),          # Wo
            pl.BlockSpec((1, H, I), lambda l: (l, 0, 0)),          # W1
            pl.BlockSpec((1, I, H), lambda l: (l, 0, 0)),          # W2
            pl.BlockSpec((1, N_VEC, VW), lambda l: (l, 0, 0)),     # packed small vectors
        ],
        out_specs=pl.BlockSpec((M, H), lambda l: (0, 0)),          # constant -> resident
        compiler_params=pltpu.CompilerParams(
            # the single (layer) grid axis carries a sequential dependency
            dimension_semantics=("arbitrary",),
        ),
    )(bias, x2d, packed["wqkv"], packed["wo"], packed["w1"], packed["w2"], packed["vecs"])

    return out2d.reshape(B, S, H)


def bert_encoder(x, mask, packed):
    if mask is None:
        mask = jnp.ones(x.shape[:2], dtype=bool)
    return _bert_encoder_impl(x, mask, packed)


# ---------------- pure-JAX reference (natural layouts) for validation ----------------
def _ln_ref(t, w, b):
    mean = t.mean(axis=-1, keepdims=True)
    var = ((t - mean) ** 2).mean(axis=-1, keepdims=True)
    return w * ((t - mean) / jnp.sqrt(var + NORM_EPS)) + b


def bert_encoder_reference(x, mask, layer_params):
    B, S, H = x.shape
    if mask is None:
        bias = jnp.zeros((B, 1, 1, S), jnp.float32)
    else:
        bias = jnp.where(mask, 0.0, MASK_NEG).astype(jnp.float32).reshape(B, 1, 1, S)
    scale = 1.0 / math.sqrt(D_K)
    for p in layer_params:
        qkv = x @ p["wqkv"] + p["bqkv"]
        q, k, v = jnp.split(qkv, 3, axis=-1)
        heads = lambda t: t.reshape(B, S, NUM_HEADS, D_K).transpose(0, 2, 1, 3)
        q, k, v = heads(q), heads(k), heads(v)
        s = jnp.einsum('bhqd,bhkd->bhqk', q, k) * scale + bias
        probs = jax.nn.softmax(s, axis=-1)
        ctx = jnp.einsum('bhqk,bhkd->bhqd', probs, v)
        y = ctx.transpose(0, 2, 1, 3).reshape(B, S, H) @ p["wo"] + p["bo"]
        x1 = _ln_ref(x + y, p["ln1w"], p["ln1b"])
        h = jax.nn.gelu(x1 @ p["w1"] + p["b1"], approximate=False)
        ff = h @ p["w2"] + p["b2"]
        x = _ln_ref(x1 + ff, p["ln2w"], p["ln2b"])
    return x


# ---------------- deterministic parameter init (natural PyTorch-like layouts) ----------------
def init_layer_params(key):
    ks = jax.random.split(key, 4)
    scale = 0.02
    return {
        "wqkv": scale * jax.random.normal(ks[0], (HIDDEN, 3 * HIDDEN), jnp.float32),
        "bqkv": jnp.zeros((3 * HIDDEN,), jnp.float32),
        "wo":   scale * jax.random.normal(ks[1], (HIDDEN, HIDDEN), jnp.float32),
        "bo":   jnp.zeros((HIDDEN,), jnp.float32),
        "ln1w": jnp.ones((HIDDEN,), jnp.float32),
        "ln1b": jnp.zeros((HIDDEN,), jnp.float32),
        "w1":   scale * jax.random.normal(ks[2], (HIDDEN, INTERMEDIATE), jnp.float32),
        "b1":   jnp.zeros((INTERMEDIATE,), jnp.float32),
        "w2":   scale * jax.random.normal(ks[3], (INTERMEDIATE, HIDDEN), jnp.float32),
        "b2":   jnp.zeros((HIDDEN,), jnp.float32),
        "ln2w": jnp.ones((HIDDEN,), jnp.float32),
        "ln2b": jnp.zeros((HIDDEN,), jnp.float32),
    }


if __name__ == "__main__":
    key = jax.random.PRNGKey(0)
    k_x, k_layers = jax.random.split(key)

    x = jax.random.normal(k_x, (BATCH, SEQ, HIDDEN), jnp.float32)

    # boolean attention mask (B, S): mask out the last 2 positions of batch element 1
    mask = jnp.ones((BATCH, SEQ), dtype=bool)
    mask = mask.at[1, -2:].set(False)

    layer_keys = jax.random.split(k_layers, NUM_LAYERS)
    layer_params = [init_layer_params(k) for k in layer_keys]

    # one-time parameter preparation (hoisted out of the forward path)
    packed = prepare_encoder_params(layer_params)
    packed = jax.tree_util.tree_map(jax.block_until_ready, packed)

    out = bert_encoder(x, mask, packed)
    out = jax.block_until_ready(out)

    assert out.shape == (BATCH, SEQ, HIDDEN)
    assert bool(jnp.all(jnp.isfinite(out)))

    # validate against a pure-JAX reference (exact softmax division -> tight tolerance)
    ref = bert_encoder_reference(x, mask, layer_params)
    max_err = float(jnp.max(jnp.abs(out - ref)))
    assert max_err < 1e-4, f"kernel/reference mismatch: max abs err = {max_err}"

    print("KERNEL_OK")
</pallas_src>

<mosaic_0001>
module attributes {stable_mosaic.version = 11 : i64} {
  func.func @bert_encoder_kernel(%arg0: i32, %arg1: memref<2x1x8xf32, #tpu.memory_space<vmem>>, %arg2: memref<16x32xf32, #tpu.memory_space<vmem>>, %arg3: memref<1x32x96xf32, #tpu.memory_space<vmem>>, %arg4: memref<1x32x32xf32, #tpu.memory_space<vmem>>, %arg5: memref<1x32x64xf32, #tpu.memory_space<vmem>>, %arg6: memref<1x64x32xf32, #tpu.memory_space<vmem>>, %arg7: memref<1x8x96xf32, #tpu.memory_space<vmem>>, %arg8: memref<16x32xf32, #tpu.memory_space<vmem>>) attributes {dimension_semantics = [#tpu.dimension_semantics<arbitrary>], iteration_bounds = array<i64: 2>, scalar_prefetch = 0 : i64, scratch_operands = 0 : i64, tpu.core_type = #tpu.core_type<tc>, window_params = [{pipeline_mode = #tpu.pipeline_mode<synchronous>, transform_indices = @transform_0, window_bounds = array<i64: 2, 1, 8>}, {pipeline_mode = #tpu.pipeline_mode<synchronous>, transform_indices = @transform_1, window_bounds = array<i64: 16, 32>}, {transform_indices = @transform_2, window_bounds = array<i64: 1, 32, 96>}, {transform_indices = @transform_3, window_bounds = array<i64: 1, 32, 32>}, {transform_indices = @transform_4, window_bounds = array<i64: 1, 32, 64>}, {transform_indices = @transform_5, window_bounds = array<i64: 1, 64, 32>}, {transform_indices = @transform_6, window_bounds = array<i64: 1, 8, 96>}, {pipeline_mode = #tpu.pipeline_mode<synchronous>, transform_indices = @transform_7, window_bounds = array<i64: 16, 32>}]} {
    %c0_i32 = arith.constant 0 : i32
    %0 = arith.cmpi eq, %arg0, %c0_i32 : i32
    %1 = arith.extui %0 : i1 to i32
    %c0_i32_0 = arith.constant 0 : i32
    %2 = arith.cmpi ne, %1, %c0_i32_0 : i32
    scf.if %2 {
      %c0_43 = arith.constant 0 : index
      %c0_44 = arith.constant 0 : index
      %151 = vector.load %arg2[%c0_43, %c0_44] : memref<16x32xf32, #tpu.memory_space<vmem>>, vector<16x32xf32>
      %c0_45 = arith.constant 0 : index
      %c0_46 = arith.constant 0 : index
      %152 = vector.load %arg8[%c0_45, %c0_46] : memref<16x32xf32, #tpu.memory_space<vmem>>, vector<16x32xf32>
      tpu.vector_store %arg8[%c0_45, %c0_46], %151 {strides = array<i32>} : memref<16x32xf32, #tpu.memory_space<vmem>>, vector<16x32xf32>,
    } else {
    }
    %c0 = arith.constant 0 : index
    %c0_1 = arith.constant 0 : index
    %3 = vector.load %arg8[%c0, %c0_1] : memref<16x32xf32, #tpu.memory_space<vmem>>, vector<16x32xf32>
    %c0_2 = arith.constant 0 : index
    %c0_3 = arith.constant 0 : index
    %c0_4 = arith.constant 0 : index
    %4 = vector.load %arg7[%c0_2, %c0_3, %c0_4] : memref<1x8x96xf32, #tpu.memory_space<vmem>>, vector<1x8x96xf32>
    %5 = vector.shape_cast %4 : vector<1x8x96xf32> to vector<8x96xf32>
    %6 = vector.extract_strided_slice %5 {offsets = [0, 0], sizes = [1, 96], strides = [1, 1]} : vector<8x96xf32> to vector<1x96xf32>
    %7 = vector.extract_strided_slice %5 {offsets = [1, 0], sizes = [1, 32], strides = [1, 1]} : vector<8x96xf32> to vector<1x32xf32>
    %8 = vector.extract_strided_slice %5 {offsets = [2, 0], sizes = [1, 32], strides = [1, 1]} : vector<8x96xf32> to vector<1x32xf32>
    %9 = vector.extract_strided_slice %5 {offsets = [3, 0], sizes = [1, 32], strides = [1, 1]} : vector<8x96xf32> to vector<1x32xf32>
    %10 = vector.extract_strided_slice %5 {offsets = [4, 0], sizes = [1, 64], strides = [1, 1]} : vector<8x96xf32> to vector<1x64xf32>
    %11 = vector.extract_strided_slice %5 {offsets = [5, 0], sizes = [1, 32], strides = [1, 1]} : vector<8x96xf32> to vector<1x32xf32>
    %12 = vector.extract_strided_slice %5 {offsets = [6, 0], sizes = [1, 32], strides = [1, 1]} : vector<8x96xf32> to vector<1x32xf32>
    %13 = vector.extract_strided_slice %5 {offsets = [7, 0], sizes = [1, 32], strides = [1, 1]} : vector<8x96xf32> to vector<1x32xf32>
    %c0_5 = arith.constant 0 : index
    %c0_6 = arith.constant 0 : index
    %c0_7 = arith.constant 0 : index
    %14 = vector.load %arg3[%c0_5, %c0_6, %c0_7] : memref<1x32x96xf32, #tpu.memory_space<vmem>>, vector<1x32x96xf32>
    %15 = vector.shape_cast %14 : vector<1x32x96xf32> to vector<32x96xf32>
    %cst = arith.constant dense<0.000000e+00> : vector<16x96xf32>
    %16 = tpu.matmul %3, %15, %cst {dimension_numbers = #tpu.dot_dimension_numbers<[1], [0], [0], [1], [0, 0, 1, 1], [], []>} : vector<16x32xf32>, vector<32x96xf32>, vector<16x96xf32> -> vector<16x96xf32>
    %17 = vector.broadcast %6 : vector<1x96xf32> to vector<16x96xf32>
    %18 = arith.addf %16, %17 : vector<16x96xf32>
    %19 = vector.extract_strided_slice %18 {offsets = [0, 0], sizes = [16, 32], strides = [1, 1]} : vector<16x96xf32> to vector<16x32xf32>
    %20 = vector.extract_strided_slice %19 {offsets = [0, 0], sizes = [16, 8], strides = [1, 1]} : vector<16x32xf32> to vector<16x8xf32>
    %21 = vector.extract_strided_slice %19 {offsets = [0, 8], sizes = [16, 8], strides = [1, 1]} : vector<16x32xf32> to vector<16x8xf32>
    %22 = vector.extract_strided_slice %19 {offsets = [0, 16], sizes = [16, 8], strides = [1, 1]} : vector<16x32xf32> to vector<16x8xf32>
    %23 = vector.extract_strided_slice %19 {offsets = [0, 24], sizes = [16, 8], strides = [1, 1]} : vector<16x32xf32> to vector<16x8xf32>
    %24 = vector.shape_cast %20 : vector<16x8xf32> to vector<1x16x8xf32>
    %25 = vector.shape_cast %21 : vector<16x8xf32> to vector<1x16x8xf32>
    %26 = vector.shape_cast %22 : vector<16x8xf32> to vector<1x16x8xf32>
    %27 = vector.shape_cast %23 : vector<16x8xf32> to vector<1x16x8xf32>
    %28 = tpu.concatenate %24, %25, %26, %27 in 0 : vector<1x16x8xf32>, vector<1x16x8xf32>, vector<1x16x8xf32>, vector<1x16x8xf32> -> vector<4x16x8xf32>
    %29 = vector.shape_cast %28 : vector<4x16x8xf32> to vector<8x8x8xf32>
    %30 = vector.extract_strided_slice %18 {offsets = [0, 32], sizes = [16, 32], strides = [1, 1]} : vector<16x96xf32> to vector<16x32xf32>
    %31 = vector.extract_strided_slice %30 {offsets = [0, 0], sizes = [16, 8], strides = [1, 1]} : vector<16x32xf32> to vector<16x8xf32>
    %32 = vector.extract_strided_slice %30 {offsets = [0, 8], sizes = [16, 8], strides = [1, 1]} : vector<16x32xf32> to vector<16x8xf32>
    %33 = vector.extract_strided_slice %30 {offsets = [0, 16], sizes = [16, 8], strides = [1, 1]} : vector<16x32xf32> to vector<16x8xf32>
    %34 = vector.extract_strided_slice %30 {offsets = [0, 24], sizes = [16, 8], strides = [1, 1]} : vector<16x32xf32> to vector<16x8xf32>
    %35 = vector.shape_cast %31 : vector<16x8xf32> to vector<1x16x8xf32>
    %36 = vector.shape_cast %32 : vector<16x8xf32> to vector<1x16x8xf32>
    %37 = vector.shape_cast %33 : vector<16x8xf32> to vector<1x16x8xf32>
    %38 = vector.shape_cast %34 : vector<16x8xf32> to vector<1x16x8xf32>
    %39 = tpu.concatenate %35, %36, %37, %38 in 0 : vector<1x16x8xf32>, vector<1x16x8xf32>, vector<1x16x8xf32>, vector<1x16x8xf32> -> vector<4x16x8xf32>
    %40 = vector.shape_cast %39 : vector<4x16x8xf32> to vector<8x8x8xf32>
    %41 = vector.extract_strided_slice %18 {offsets = [0, 64], sizes = [16, 32], strides = [1, 1]} : vector<16x96xf32> to vector<16x32xf32>
    %42 = vector.extract_strided_slice %41 {offsets = [0, 0], sizes = [16, 8], strides = [1, 1]} : vector<16x32xf32> to vector<16x8xf32>
    %43 = vector.extract_strided_slice %41 {offsets = [0, 8], sizes = [16, 8], strides = [1, 1]} : vector<16x32xf32> to vector<16x8xf32>
    %44 = vector.extract_strided_slice %41 {offsets = [0, 16], sizes = [16, 8], strides = [1, 1]} : vector<16x32xf32> to vector<16x8xf32>
    %45 = vector.extract_strided_slice %41 {offsets = [0, 24], sizes = [16, 8], strides = [1, 1]} : vector<16x32xf32> to vector<16x8xf32>
    %46 = vector.shape_cast %42 : vector<16x8xf32> to vector<1x16x8xf32>
    %47 = vector.shape_cast %43 : vector<16x8xf32> to vector<1x16x8xf32>
    %48 = vector.shape_cast %44 : vector<16x8xf32> to vector<1x16x8xf32>
    %49 = vector.shape_cast %45 : vector<16x8xf32> to vector<1x16x8xf32>
    %50 = tpu.concatenate %46, %47, %48, %49 in 0 : vector<1x16x8xf32>, vector<1x16x8xf32>, vector<1x16x8xf32>, vector<1x16x8xf32> -> vector<4x16x8xf32>
    %51 = vector.shape_cast %50 : vector<4x16x8xf32> to vector<8x8x8xf32>
    "tpu.trace_start"() <{level = 10 : i32, message = "xqd,xkd->xqk"}> : () -> ()
    %cst_8 = arith.constant dense<0.000000e+00> : vector<8x8x8xf32>
    %52 = tpu.matmul %29, %40, %cst_8 {dimension_numbers = #tpu.dot_dimension_numbers<[2], [2], [1], [1], [0, 0, 0, 1, 1, 1], [0], [0]>} : vector<8x8x8xf32>, vector<8x8x8xf32>, vector<8x8x8xf32> -> vector<8x8x8xf32>
    "tpu.trace_stop"() : () -> ()
    %53 = vector.shape_cast %52 : vector<8x8x8xf32> to vector<4x2x8x8xf32>
    %c0_9 = arith.constant 0 : index
    %c0_10 = arith.constant 0 : index
    %c0_11 = arith.constant 0 : index
    %54 = vector.load %arg1[%c0_9, %c0_10, %c0_11] : memref<2x1x8xf32, #tpu.memory_space<vmem>>, vector<2x1x8xf32>
    %55 = vector.shape_cast %54 : vector<2x1x8xf32> to vector<1x2x1x8xf32>
    %56 = vector.broadcast %55 : vector<1x2x1x8xf32> to vector<4x2x8x8xf32>
    %57 = arith.addf %53, %56 : vector<4x2x8x8xf32>
    %58 = vector.shape_cast %57 : vector<4x2x8x8xf32> to vector<8x8x8xf32>
    %cst_12 = arith.constant dense<0xFF800000> : vector<8x8xf32>
    %59 = vector.multi_reduction <maximumf>, %58, %cst_12 [2] : vector<8x8x8xf32> to vector<8x8xf32>
    %60 = vector.shape_cast %59 : vector<8x8xf32> to vector<8x8x1xf32>
    %61 = vector.broadcast %60 : vector<8x8x1xf32> to vector<8x8x8xf32>
    %62 = arith.subf %58, %61 : vector<8x8x8xf32>
    %63 = math.exp %62 : vector<8x8x8xf32>
    %cst_13 = arith.constant dense<0.000000e+00> : vector<8x8xf32>
    %64 = vector.multi_reduction <add>, %63, %cst_13 [2] : vector<8x8x8xf32> to vector<8x8xf32>
    %65 = vector.shape_cast %64 : vector<8x8xf32> to vector<8x8x1xf32>
    %cst_14 = arith.constant 1.000000e+00 : f32
    %66 = vector.broadcast %cst_14 : f32 to vector<8x8x1xf32>
    %67 = arith.divf %66, %65 : vector<8x8x1xf32>
    %68 = vector.broadcast %67 : vector<8x8x1xf32> to vector<8x8x8xf32>
    %69 = arith.mulf %63, %68 : vector<8x8x8xf32>
    "tpu.trace_start"() <{level = 10 : i32, message = "xqk,xkd->xqd"}> : () -> ()
    %cst_15 = arith.constant dense<0.000000e+00> : vector<8x8x8xf32>
    %70 = tpu.matmul %69, %51, %cst_15 {dimension_numbers = #tpu.dot_dimension_numbers<[2], [1], [1], [2], [0, 0, 0, 1, 1, 2], [0], [0]>} : vector<8x8x8xf32>, vector<8x8x8xf32>, vector<8x8x8xf32> -> vector<8x8x8xf32>
    "tpu.trace_stop"() : () -> ()
    %71 = vector.shape_cast %70 : vector<8x8x8xf32> to vector<4x16x8xf32>
    %72 = vector.extract_strided_slice %71 {offsets = [0, 0, 0], sizes = [1, 16, 8], strides = [1, 1, 1]} : vector<4x16x8xf32> to vector<1x16x8xf32>
    %73 = vector.shape_cast %72 : vector<1x16x8xf32> to vector<16x8xf32>
    %74 = vector.extract_strided_slice %71 {offsets = [1, 0, 0], sizes = [1, 16, 8], strides = [1, 1, 1]} : vector<4x16x8xf32> to vector<1x16x8xf32>
    %75 = vector.shape_cast %74 : vector<1x16x8xf32> to vector<16x8xf32>
    %76 = vector.extract_strided_slice %71 {offsets = [2, 0, 0], sizes = [1, 16, 8], strides = [1, 1, 1]} : vector<4x16x8xf32> to vector<1x16x8xf32>
    %77 = vector.shape_cast %76 : vector<1x16x8xf32> to vector<16x8xf32>
    %78 = vector.extract_strided_slice %71 {offsets = [3, 0, 0], sizes = [1, 16, 8], strides = [1, 1, 1]} : vector<4x16x8xf32> to vector<1x16x8xf32>
    %79 = vector.shape_cast %78 : vector<1x16x8xf32> to vector<16x8xf32>
    %80 = tpu.concatenate %73, %75, %77, %79 in 1 : vector<16x8xf32>, vector<16x8xf32>, vector<16x8xf32>, vector<16x8xf32> -> vector<16x32xf32>
    %c0_16 = arith.constant 0 : index
    %c0_17 = arith.constant 0 : index
    %c0_18 = arith.constant 0 : index
    %81 = vector.load %arg4[%c0_16, %c0_17, %c0_18] : memref<1x32x32xf32, #tpu.memory_space<vmem>>, vector<1x32x32xf32>
    %82 = vector.shape_cast %81 : vector<1x32x32xf32> to vector<32x32xf32>
    %cst_19 = arith.constant dense<0.000000e+00> : vector<16x32xf32>
    %83 = tpu.matmul %80, %82, %cst_19 {dimension_numbers = #tpu.dot_dimension_numbers<[1], [0], [0], [1], [0, 0, 1, 1], [], []>} : vector<16x32xf32>, vector<32x32xf32>, vector<16x32xf32> -> vector<16x32xf32>
    %84 = vector.broadcast %7 : vector<1x32xf32> to vector<16x32xf32>
    %85 = arith.addf %83, %84 : vector<16x32xf32>
    %86 = arith.addf %3, %85 : vector<16x32xf32>
    %cst_20 = arith.constant dense<0.000000e+00> : vector<16xf32>
    %87 = vector.multi_reduction <add>, %86, %cst_20 [1] : vector<16x32xf32> to vector<16xf32>
    %88 = vector.shape_cast %87 : vector<16xf32> to vector<16x1xf32>
    %cst_21 = arith.constant 3.200000e+01 : f32
    %89 = vector.broadcast %cst_21 : f32 to vector<16x1xf32>
    %90 = arith.divf %88, %89 : vector<16x1xf32>
    %91 = vector.broadcast %90 : vector<16x1xf32> to vector<16x32xf32>
    %92 = arith.subf %86, %91 : vector<16x32xf32>
    %93 = arith.mulf %92, %92 : vector<16x32xf32>
    %cst_22 = arith.constant dense<0.000000e+00> : vector<16xf32>
    %94 = vector.multi_reduction <add>, %93, %cst_22 [1] : vector<16x32xf32> to vector<16xf32>
    %95 = vector.shape_cast %94 : vector<16xf32> to vector<16x1xf32>
    %cst_23 = arith.constant 3.200000e+01 : f32
    %96 = vector.broadcast %cst_23 : f32 to vector<16x1xf32>
    %97 = arith.divf %95, %96 : vector<16x1xf32>
    %cst_24 = arith.constant 1.000000e-07 : f32
    %98 = vector.broadcast %cst_24 : f32 to vector<16x1xf32>
    %99 = arith.addf %97, %98 : vector<16x1xf32>
    %100 = math.rsqrt %99 : vector<16x1xf32>
    %101 = vector.broadcast %90 : vector<16x1xf32> to vector<16x32xf32>
    %102 = arith.subf %86, %101 : vector<16x32xf32>
    %103 = vector.broadcast %100 : vector<16x1xf32> to vector<16x32xf32>
    %104 = arith.mulf %102, %103 : vector<16x32xf32>
    %105 = vector.broadcast %8 : vector<1x32xf32> to vector<16x32xf32>
    %106 = arith.mulf %105, %104 : vector<16x32xf32>
    %107 = vector.broadcast %9 : vector<1x32xf32> to vector<16x32xf32>
    %108 = arith.addf %106, %107 : vector<16x32xf32>
    %c0_25 = arith.constant 0 : index
    %c0_26 = arith.constant 0 : index
    %c0_27 = arith.constant 0 : index
    %109 = vector.load %arg5[%c0_25, %c0_26, %c0_27] : memref<1x32x64xf32, #tpu.memory_space<vmem>>, vector<1x32x64xf32>
    %110 = vector.shape_cast %109 : vector<1x32x64xf32> to vector<32x64xf32>
    %cst_28 = arith.constant dense<0.000000e+00> : vector<16x64xf32>
    %111 = tpu.matmul %108, %110, %cst_28 {dimension_numbers = #tpu.dot_dimension_numbers<[1], [0], [0], [1], [0, 0, 1, 1], [], []>} : vector<16x32xf32>, vector<32x64xf32>, vector<16x64xf32> -> vector<16x64xf32>
    %112 = vector.broadcast %10 : vector<1x64xf32> to vector<16x64xf32>
    %113 = arith.addf %111, %112 : vector<16x64xf32>
    %cst_29 = arith.constant 5.000000e-01 : f32
    %114 = vector.broadcast %cst_29 : f32 to vector<16x64xf32>
    %115 = arith.mulf %114, %113 : vector<16x64xf32>
    %cst_30 = arith.constant 0.707106769 : f32
    %116 = vector.broadcast %cst_30 : f32 to vector<16x64xf32>
    %117 = arith.mulf %113, %116 : vector<16x64xf32>
    %118 = math.erf %117 : vector<16x64xf32>
    %cst_31 = arith.constant 1.000000e+00 : f32
    %119 = vector.broadcast %cst_31 : f32 to vector<16x64xf32>
    %120 = arith.addf %119, %118 : vector<16x64xf32>
    %121 = arith.mulf %115, %120 : vector<16x64xf32>
    %c0_32 = arith.constant 0 : index
    %c0_33 = arith.constant 0 : index
    %c0_34 = arith.constant 0 : index
    %122 = vector.load %arg6[%c0_32, %c0_33, %c0_34] : memref<1x64x32xf32, #tpu.memory_space<vmem>>, vector<1x64x32xf32>
    %123 = vector.shape_cast %122 : vector<1x64x32xf32> to vector<64x32xf32>
    %cst_35 = arith.constant dense<0.000000e+00> : vector<16x32xf32>
    %124 = tpu.matmul %121, %123, %cst_35 {dimension_numbers = #tpu.dot_dimension_numbers<[1], [0], [0], [1], [0, 0, 1, 1], [], []>} : vector<16x64xf32>, vector<64x32xf32>, vector<16x32xf32> -> vector<16x32xf32>
    %125 = vector.broadcast %11 : vector<1x32xf32> to vector<16x32xf32>
    %126 = arith.addf %124, %125 : vector<16x32xf32>
    %127 = arith.addf %108, %126 : vector<16x32xf32>
    %cst_36 = arith.constant dense<0.000000e+00> : vector<16xf32>
    %128 = vector.multi_reduction <add>, %127, %cst_36 [1] : vector<16x32xf32> to vector<16xf32>
    %129 = vector.shape_cast %128 : vector<16xf32> to vector<16x1xf32>
    %cst_37 = arith.constant 3.200000e+01 : f32
    %130 = vector.broadcast %cst_37 : f32 to vector<16x1xf32>
    %131 = arith.divf %129, %130 : vector<16x1xf32>
    %132 = vector.broadcast %131 : vector<16x1xf32> to vector<16x32xf32>
    %133 = arith.subf %127, %132 : vector<16x32xf32>
    %134 = arith.mulf %133, %133 : vector<16x32xf32>
    %cst_38 = arith.constant dense<0.000000e+00> : vector<16xf32>
    %135 = vector.multi_reduction <add>, %134, %cst_38 [1] : vector<16x32xf32> to vector<16xf32>
    %136 = vector.shape_cast %135 : vector<16xf32> to vector<16x1xf32>
    %cst_39 = arith.constant 3.200000e+01 : f32
    %137 = vector.broadcast %cst_39 : f32 to vector<16x1xf32>
    %138 = arith.divf %136, %137 : vector<16x1xf32>
    %cst_40 = arith.constant 1.000000e-07 : f32
    %139 = vector.broadcast %cst_40 : f32 to vector<16x1xf32>
    %140 = arith.addf %138, %139 : vector<16x1xf32>
    %141 = math.rsqrt %140 : vector<16x1xf32>
    %142 = vector.broadcast %131 : vector<16x1xf32> to vector<16x32xf32>
    %143 = arith.subf %127, %142 : vector<16x32xf32>
    %144 = vector.broadcast %141 : vector<16x1xf32> to vector<16x32xf32>
    %145 = arith.mulf %143, %144 : vector<16x32xf32>
    %146 = vector.broadcast %12 : vector<1x32xf32> to vector<16x32xf32>
    %147 = arith.mulf %146, %145 : vector<16x32xf32>
    %148 = vector.broadcast %13 : vector<1x32xf32> to vector<16x32xf32>
    %149 = arith.addf %147, %148 : vector<16x32xf32>
    %c0_41 = arith.constant 0 : index
    %c0_42 = arith.constant 0 : index
    %150 = vector.load %arg8[%c0_41, %c0_42] : memref<16x32xf32, #tpu.memory_space<vmem>>, vector<16x32xf32>
    tpu.vector_store %arg8[%c0_41, %c0_42], %149 {strides = array<i32>} : memref<16x32xf32, #tpu.memory_space<vmem>>, vector<16x32xf32>,
    return
  }
  func.func @transform_0(%arg0: i32) -> (i32, i32, i32) {
    %c0_i32 = arith.constant 0 : i32
    %c0_i32_0 = arith.constant 0 : i32
    %c0_i32_1 = arith.constant 0 : i32
    %c0_i32_2 = arith.constant 0 : i32
    return %c0_i32, %c0_i32_0, %c0_i32_1 : i32, i32, i32
  }
  func.func @transform_1(%arg0: i32) -> (i32, i32) {
    %c0_i32 = arith.constant 0 : i32
    %c0_i32_0 = arith.constant 0 : i32
    %c0_i32_1 = arith.constant 0 : i32
    return %c0_i32, %c0_i32_0 : i32, i32
  }
  func.func @transform_2(%arg0: i32) -> (i32, i32, i32) {
    %c0_i32 = arith.constant 0 : i32
    %c0_i32_0 = arith.constant 0 : i32
    %c0_i32_1 = arith.constant 0 : i32
    return %arg0, %c0_i32, %c0_i32_0 : i32, i32, i32
  }
  func.func @transform_3(%arg0: i32) -> (i32, i32, i32) {
    %c0_i32 = arith.constant 0 : i32
    %c0_i32_0 = arith.constant 0 : i32
    %c0_i32_1 = arith.constant 0 : i32
    return %arg0, %c0_i32, %c0_i32_0 : i32, i32, i32
  }
  func.func @transform_4(%arg0: i32) -> (i32, i32, i32) {
    %c0_i32 = arith.constant 0 : i32
    %c0_i32_0 = arith.constant 0 : i32
    %c0_i32_1 = arith.constant 0 : i32
    return %arg0, %c0_i32, %c0_i32_0 : i32, i32, i32
  }
  func.func @transform_5(%arg0: i32) -> (i32, i32, i32) {
    %c0_i32 = arith.constant 0 : i32
    %c0_i32_0 = arith.constant 0 : i32
    %c0_i32_1 = arith.constant 0 : i32
    return %arg0, %c0_i32, %c0_i32_0 : i32, i32, i32
  }
  func.func @transform_6(%arg0: i32) -> (i32, i32, i32) {
    %c0_i32 = arith.constant 0 : i32
    %c0_i32_0 = arith.constant 0 : i32
    %c0_i32_1 = arith.constant 0 : i32
    return %arg0, %c0_i32, %c0_i32_0 : i32, i32, i32
  }
  func.func @transform_7(%arg0: i32) -> (i32, i32) {
    %c0_i32 = arith.constant 0 : i32
    %c0_i32_0 = arith.constant 0 : i32
    %c0_i32_1 = arith.constant 0 : i32
    return %c0_i32, %c0_i32_0 : i32, i32
  }
}

</mosaic_0001>

<llo_original>
// kernel: _bert_encoder_impl.1
$region0: #{_bert_encoder_impl.1}
  #allocation0 [shape = 'u32[]', space=smem, size = 0x4, offset = 0x4, fixed_abs, tag = 'smem constant byte address 0x4 - core index']
  #allocation1 [shape = 'u32[144,128]{1,0:T(1,128)}', space=vmem, size = 0x12000, scoped, tag = 'internal scratch']
  %s0 = inlined_call_operand.vmem [shape: f32[2,1,8], index: 0, kind: input, shape index: {}]
  %s1 = inlined_call_operand.hbm [shape: f32[16,32], index: 1, kind: input, shape index: {}]
  %s2 = inlined_call_operand.vmem [shape: f32[2,32,96], index: 2, kind: input, shape index: {}]
  %s3 = inlined_call_operand.vmem [shape: f32[2,32,32], index: 3, kind: input, shape index: {}]
  %s4 = inlined_call_operand.vmem [shape: f32[2,32,64], index: 4, kind: input, shape index: {}]
  %s5 = inlined_call_operand.vmem [shape: f32[2,64,32], index: 5, kind: input, shape index: {}]
  %s6 = inlined_call_operand.vmem [shape: f32[2,8,96], index: 6, kind: input, shape index: {}]
  %s7 = inlined_call_operand.hbm [shape: f32[16,32], index: 7, kind: output, shape index: {}]
  %s8 = sld [smem:[#allocation0]]
  $region69: #{_bert_encoder_impl.1} parent=0
    _
  %s10 = ssub.s32 1, %s8
  %s11 = scalar_select 0, %s10, %s8
  $region1: #{_bert_encoder_impl.1} parent=0
    #allocation2 [shape = 'u8[8192]{0}', space=vmem, size = 0x2000, scoped, tag = 'input window, operand 1, single buffered']
    #allocation3 [shape = 's32[2]{0}', space=sflag, size = 0x8, scoped, tag = 'scoped memory for _bert_encoder_impl.1']
    #allocation4 [shape = 's32[2]{0}', space=sflag, size = 0x8, scoped, tag = 'scoped memory for _bert_encoder_impl.1']
    #allocation5 [shape = 'u8[8192]{0}', space=vmem, size = 0x2000, scoped, tag = 'output window, operand 0, single buffered']
    %12 = vsyncpa [#allocation3], 0
    %13 = vsyncpa [#allocation4], 0
    loop: start=0, step=1, limit=4
    $region2: #{_bert_encoder_impl.1} parent=1 // loop_pre_header
      _
    $region3: #{_bert_encoder_impl.1} parent=1 // loop_header
      %s15 = sphi 0, %s19
      %p16 = scmp.ge.s32.totalorder %s15, 4
      %s23 = sphi 0, %s23
      %s25 = sphi 0, %s23
      %s26 = sphi 0, %s25
      %s40 = sphi 0, %s26
      %s44 = sphi 0, %s44
      %s46 = sphi 0, %s44
      %s47 = sphi 0, %s46
      %s61 = sphi 0, %s47
      %s67 = sphi 0, %s69
      %s70 = sphi 0, %s67
      %s71 = sphi 0, %s70
      %s87 = sphi 0, %s71
      %s93 = sphi 0, %s95
      %s96 = sphi 0, %s93
      %s97 = sphi 0, %s96
      %s113 = sphi 0, %s97
      %s119 = sphi 0, %s121
      %s122 = sphi 0, %s119
      %s123 = sphi 0, %s122
      %s139 = sphi 0, %s123
      %s145 = sphi 0, %s147
      %s148 = sphi 0, %s145
      %s149 = sphi 0, %s148
      %s165 = sphi 0, %s149
      %s171 = sphi 0, %s173
      %s174 = sphi 0, %s171
      %s175 = sphi 0, %s174
      %s191 = sphi 0, %s175
      %s195 = sphi 0, %s195
      %s197 = sphi 0, %s195
      %s198 = sphi 0, %s197
      %s212 = sphi 0, %s198
    $region4: #{_bert_encoder_impl.1} parent=1 // loop_header_branch
      %18 = sbr.rel (%p16) target = $region8
    $region5: #{_bert_encoder_impl.1} parent=1 // loop_body
      %s20 = ssub.s32 %s15, 1
      %s21 = ssub.s32 %s15, 2
      %s22 = sadd.s32 %s15, 1
      %s24 = sadd.s32 %s23, 1
      %p27 = scmp.eq.s32.totalorder %s15, 1
      %p28 = scmp.ne.s32.totalorder %s23, %s25
      %p29 = scmp.eq.s32.totalorder %s15, 0
      %p30 = por %p28, %p29
      %p31 = scmp.ne.s32.totalorder %s23, %s25
      %p32 = scmp.eq.s32.totalorder %s20, 1
      %p33 = por %p31, %p32
      %p34 = scmp.ne.s32.totalorder %s25, %s26
      %p35 = scmp.eq.s32.totalorder %s20, 0
      %p36 = por %p34, %p35
      %p37 = scmp.ne.s32.totalorder %s25, %s26
      %p38 = scmp.eq.s32.totalorder %s21, 1
      %p39 = por %p37, %p38
      %p41 = scmp.ne.s32.totalorder %s26, %s40
      %p42 = scmp.eq.s32.totalorder %s21, 0
      %p43 = por %p41, %p42
      %s45 = sadd.s32 %s44, 1
      %p48 = scmp.eq.s32.totalorder %s15, 1
      %p49 = scmp.ne.s32.totalorder %s44, %s46
      %p50 = scmp.eq.s32.totalorder %s15, 0
      %p51 = por %p49, %p50
      %p52 = scmp.ne.s32.totalorder %s44, %s46
      %p53 = scmp.eq.s32.totalorder %s20, 1
      %p54 = por %p52, %p53
      %p55 = scmp.ne.s32.totalorder %s46, %s47
      %p56 = scmp.eq.s32.totalorder %s20, 0
      %p57 = por %p55, %p56
      %p58 = scmp.ne.s32.totalorder %s46, %s47
      %p59 = scmp.eq.s32.totalorder %s21, 1
      %p60 = por %p58, %p59
      %p62 = scmp.ne.s32.totalorder %s47, %s61
      %p63 = scmp.eq.s32.totalorder %s21, 0
      %p64 = por %p62, %p63
      %s65 = ssub.s32 %s15, %s22
      %p66 = scmp.eq.s32.totalorder %s65, 0
      %s68 = sadd.s32 %s67, 1
      %s69 = scalar_select %p66, %s67, %s68
      %p72 = pneg %p66
      %p73 = scmp.eq.s32.totalorder %s15, 1
      %p74 = por %p72, %p73
      %p75 = scmp.ne.s32.totalorder %s67, %s70
      %p76 = scmp.eq.s32.totalorder %s15, 0
      %p77 = por %p75, %p76
      %p78 = scmp.ne.s32.totalorder %s67, %s70
      %p79 = scmp.eq.s32.totalorder %s20, 1
      %p80 = por %p78, %p79
      %p81 = scmp.ne.s32.totalorder %s70, %s71
      %p82 = scmp.eq.s32.totalorder %s20, 0
      %p83 = por %p81, %p82
      %p84 = scmp.ne.s32.totalorder %s70, %s71
      %p85 = scmp.eq.s32.totalorder %s21, 1
      %p86 = por %p84, %p85
      %p88 = scmp.ne.s32.totalorder %s71, %s87
      %p89 = scmp.eq.s32.totalorder %s21, 0
      %p90 = por %p88, %p89
      %s91 = ssub.s32 %s15, %s22
      %p92 = scmp.eq.s32.totalorder %s91, 0
      %s94 = sadd.s32 %s93, 1
      %s95 = scalar_select %p92, %s93, %s94
      %p98 = pneg %p92
      %p99 = scmp.eq.s32.totalorder %s15, 1
      %p100 = por %p98, %p99
      %p101 = scmp.ne.s32.totalorder %s93, %s96
      %p102 = scmp.eq.s32.totalorder %s15, 0
      %p103 = por %p101, %p102
      %p104 = scmp.ne.s32.totalorder %s93, %s96
      %p105 = scmp.eq.s32.totalorder %s20, 1
      %p106 = por %p104, %p105
      %p107 = scmp.ne.s32.totalorder %s96, %s97
      %p108 = scmp.eq.s32.totalorder %s20, 0
      %p109 = por %p107, %p108
      %p110 = scmp.ne.s32.totalorder %s96, %s97
      %p111 = scmp.eq.s32.totalorder %s21, 1
      %p112 = por %p110, %p111
      %p114 = scmp.ne.s32.totalorder %s97, %s113
      %p115 = scmp.eq.s32.totalorder %s21, 0
      %p116 = por %p114, %p115
      %s117 = ssub.s32 %s15, %s22
      %p118 = scmp.eq.s32.totalorder %s117, 0
      %s120 = sadd.s32 %s119, 1
      %s121 = scalar_select %p118, %s119, %s120
      %p124 = pneg %p118
      %p125 = scmp.eq.s32.totalorder %s15, 1
      %p126 = por %p124, %p125
      %p127 = scmp.ne.s32.totalorder %s119, %s122
      %p128 = scmp.eq.s32.totalorder %s15, 0
      %p129 = por %p127, %p128
      %p130 = scmp.ne.s32.totalorder %s119, %s122
      %p131 = scmp.eq.s32.totalorder %s20, 1
      %p132 = por %p130, %p131
      %p133 = scmp.ne.s32.totalorder %s122, %s123
      %p134 = scmp.eq.s32.totalorder %s20, 0
      %p135 = por %p133, %p134
      %p136 = scmp.ne.s32.totalorder %s122, %s123
      %p137 = scmp.eq.s32.totalorder %s21, 1
      %p138 = por %p136, %p137
      %p140 = scmp.ne.s32.totalorder %s123, %s139
      %p141 = scmp.eq.s32.totalorder %s21, 0
      %p142 = por %p140, %p141
      %s143 = ssub.s32 %s15, %s22
      %p144 = scmp.eq.s32.totalorder %s143, 0
      %s146 = sadd.s32 %s145, 1
      %s147 = scalar_select %p144, %s145, %s146
      %p150 = pneg %p144
      %p151 = scmp.eq.s32.totalorder %s15, 1
      %p152 = por %p150, %p151
      %p153 = scmp.ne.s32.totalorder %s145, %s148
      %p154 = scmp.eq.s32.totalorder %s15, 0
      %p155 = por %p153, %p154
      %p156 = scmp.ne.s32.totalorder %s145, %s148
      %p157 = scmp.eq.s32.totalorder %s20, 1
      %p158 = por %p156, %p157
      %p159 = scmp.ne.s32.totalorder %s148, %s149
      %p160 = scmp.eq.s32.totalorder %s20, 0
      %p161 = por %p159, %p160
      %p162 = scmp.ne.s32.totalorder %s148, %s149
      %p163 = scmp.eq.s32.totalorder %s21, 1
      %p164 = por %p162, %p163
      %p166 = scmp.ne.s32.totalorder %s149, %s165
      %p167 = scmp.eq.s32.totalorder %s21, 0
      %p168 = por %p166, %p167
      %s169 = ssub.s32 %s15, %s22
      %p170 = scmp.eq.s32.totalorder %s169, 0
      %s172 = sadd.s32 %s171, 1
      %s173 = scalar_select %p170, %s171, %s172
      %p176 = pneg %p170
      %p177 = scmp.eq.s32.totalorder %s15, 1
      %p178 = por %p176, %p177
      %p179 = scmp.ne.s32.totalorder %s171, %s174
      %p180 = scmp.eq.s32.totalorder %s15, 0
      %p181 = por %p179, %p180
      %p182 = scmp.ne.s32.totalorder %s171, %s174
      %p183 = scmp.eq.s32.totalorder %s20, 1
      %p184 = por %p182, %p183
      %p185 = scmp.ne.s32.totalorder %s174, %s175
      %p186 = scmp.eq.s32.totalorder %s20, 0
      %p187 = por %p185, %p186
      %p188 = scmp.ne.s32.totalorder %s174, %s175
      %p189 = scmp.eq.s32.totalorder %s21, 1
      %p190 = por %p188, %p189
      %p192 = scmp.ne.s32.totalorder %s175, %s191
      %p193 = scmp.eq.s32.totalorder %s21, 0
      %p194 = por %p192, %p193
      %s196 = sadd.s32 %s195, 1
      %p199 = scmp.eq.s32.totalorder %s15, 1
      %p200 = scmp.ne.s32.totalorder %s195, %s197
      %p201 = scmp.eq.s32.totalorder %s15, 0
      %p202 = por %p200, %p201
      %p203 = scmp.ne.s32.totalorder %s195, %s197
      %p204 = scmp.eq.s32.totalorder %s20, 1
      %p205 = por %p203, %p204
      %p206 = scmp.ne.s32.totalorder %s197, %s198
      %p207 = scmp.eq.s32.totalorder %s20, 0
      %p208 = por %p206, %p207
      %p209 = scmp.ne.s32.totalorder %s197, %s198
      %p210 = scmp.eq.s32.totalorder %s21, 1
      %p211 = por %p209, %p210
      %p213 = scmp.ne.s32.totalorder %s198, %s212
      %p214 = scmp.eq.s32.totalorder %s21, 0
      %p215 = por %p213, %p214
      %p216 = scmp.le.s32.totalorder 1, %s15
      %p217 = scmp.lt.s32.totalorder %s15, 3
      %p218 = pnand %p216, %p217
      %p219 = pneg %p218
      // Predicated region
      $region9: #{_bert_encoder_impl.1} parent=5 // pred_check
        _
      $region10: #{_bert_encoder_impl.1} parent=5 // pred_check_branch
        %221 = sbr.rel (%p218) target = $region12
      $region11: #{_bert_encoder_impl.1} parent=5 // pred_region
        %s222 = ssub.s32 %s15, 1
        // Predicated region
        $region13: #{_bert_encoder_impl.1} parent=11 // pred_check
          %p223 = pneg %p36
        $region14: #{_bert_encoder_impl.1} parent=11 // pred_check_branch
          %225 = sbr.rel (%p223) target = $region16
        $region15: #{_bert_encoder_impl.1} parent=11 // pred_region
          _
        $region16: #{_bert_encoder_impl.1} parent=11 // pred_fallthru
          _
        // Predicated region
        $region17: #{_bert_encoder_impl.1} parent=11 // pred_check
          %p226 = pneg %p57
        $region18: #{_bert_encoder_impl.1} parent=11 // pred_check_branch
          %228 = sbr.rel (%p226) target = $region20
        $region19: #{_bert_encoder_impl.1} parent=11 // pred_region
          %s230 = ssub.s32 256, 256
          %231 = vsyncadd [#allocation3], %s230
          %s232 = sshll.u32 [#allocation2], 4
          %s233 = int_to_ptr.vmem [resolvable:$true] %s232
          %238 = dma.hbm_to_vmem [thread:$0]  %s1, 256, %s233, [#allocation3], 128, 128, 8
        $region20: #{_bert_encoder_impl.1} parent=11 // pred_fallthru
          _
      $region12: #{_bert_encoder_impl.1} parent=5 // pred_fallthru
        _
      %p239 = scmp.lt.s32.totalorder %s15, 2
      // Predicated region
      $region21: #{_bert_encoder_impl.1} parent=5 // pred_check
        %p240 = pneg %p239
      $region22: #{_bert_encoder_impl.1} parent=5 // pred_check_branch
        %242 = sbr.rel (%p240) target = $region24
      $region23: #{_bert_encoder_impl.1} parent=5 // pred_region
        // Predicated region
        $region25: #{_bert_encoder_impl.1} parent=23 // pred_check
          %p243 = pneg %p77
        $region26: #{_bert_encoder_impl.1} parent=23 // pred_check_branch
          %245 = sbr.rel (%p243) target = $region28
        $region27: #{_bert_encoder_impl.1} parent=23 // pred_region
          %p246 = scmp.lt.s32.totalorder %s15, 1
          %s247 = scalar_select %p246, %s15, 1
          %s248 = smul.addr %s247, 4
          %s249 = smul.addr %s248, 8
          %s250 = scalar_lea.vmem %s2, %s249
        $region28: #{_bert_encoder_impl.1} parent=23 // pred_fallthru
          _
        // Predicated region
        $region29: #{_bert_encoder_impl.1} parent=23 // pred_check
          %p251 = pneg %p103
        $region30: #{_bert_encoder_impl.1} parent=23 // pred_check_branch
          %253 = sbr.rel (%p251) target = $region32
        $region31: #{_bert_encoder_impl.1} parent=23 // pred_region
          %p254 = scmp.lt.s32.totalorder %s15, 1
          %s255 = scalar_select %p254, %s15, 1
          %s256 = smul.addr %s255, 4
          %s257 = smul.addr %s256, 8
          %s258 = scalar_lea.vmem %s3, %s257
        $region32: #{_bert_encoder_impl.1} parent=23 // pred_fallthru
          _
        // Predicated region
        $region33: #{_bert_encoder_impl.1} parent=23 // pred_check
          %p259 = pneg %p129
        $region34: #{_bert_encoder_impl.1} parent=23 // pred_check_branch
          %261 = sbr.rel (%p259) target = $region36
        $region35: #{_bert_encoder_impl.1} parent=23 // pred_region
          %p262 = scmp.lt.s32.totalorder %s15, 1
          %s263 = scalar_select %p262, %s15, 1
          %s264 = smul.addr %s263, 4
          %s265 = smul.addr %s264, 8
          %s266 = scalar_lea.vmem %s4, %s265
        $region36: #{_bert_encoder_impl.1} parent=23 // pred_fallthru
          _
        // Predicated region
        $region37: #{_bert_encoder_impl.1} parent=23 // pred_check
          %p267 = pneg %p155
        $region38: #{_bert_encoder_impl.1} parent=23 // pred_check_branch
          %269 = sbr.rel (%p267) target = $region40
        $region39: #{_bert_encoder_impl.1} parent=23 // pred_region
          %p270 = scmp.lt.s32.totalorder %s15, 1
          %s271 = scalar_select %p270, %s15, 1
          %s272 = smul.addr %s271, 8
          %s273 = smul.addr %s272, 8
          %s274 = scalar_lea.vmem %s5, %s273
        $region40: #{_bert_encoder_impl.1} parent=23 // pred_fallthru
          _
        // Predicated region
        $region41: #{_bert_encoder_impl.1} parent=23 // pred_check
          %p275 = pneg %p181
        $region42: #{_bert_encoder_impl.1} parent=23 // pred_check_branch
          %277 = sbr.rel (%p275) target = $region44
        $region43: #{_bert_encoder_impl.1} parent=23 // pred_region
          %p278 = scmp.lt.s32.totalorder %s15, 1
          %s279 = scalar_select %p278, %s15, 1
          %s280 = smul.addr %s279, 8
          %s281 = scalar_lea.vmem %s6, %s280
        $region44: #{_bert_encoder_impl.1} parent=23 // pred_fallthru
          _
      $region24: #{_bert_encoder_impl.1} parent=5 // pred_fallthru
        _
      %p282 = scmp.le.s32.totalorder 1, %s15
      %p283 = scmp.lt.s32.totalorder %s15, 3
      %p284 = pnand %p282, %p283
      %p285 = pneg %p284
      // Predicated region
      $region45: #{_bert_encoder_impl.1} parent=5 // pred_check
        _
      $region46: #{_bert_encoder_impl.1} parent=5 // pred_check_branch
        %287 = sbr.rel (%p284) target = $region48
      $region47: #{_bert_encoder_impl.1} parent=5 // pred_region
        %s288 = ssub.s32 %s15, 1
        // Predicated region
        $region49: #{_bert_encoder_impl.1} parent=47 // pred_check
          %p289 = pneg %p57
        $region50: #{_bert_encoder_impl.1} parent=47 // pred_check_branch
          %291 = sbr.rel (%p289) target = $region52
        $region51: #{_bert_encoder_impl.1} parent=47 // pred_region
          %292 = dma.done [#allocation3], 256
        $region52: #{_bert_encoder_impl.1} parent=47 // pred_fallthru
          _
        %p293 = pneg %p36
        %p294 = pneg %p33
        %p295 = pneg %p57
        %p296 = pneg %p54
        %p297 = scmp.lt.s32.totalorder %s20, 1
        %s298 = scalar_select %p297, %s20, 1
        %s299 = smul.addr %s298, 4
        %s300 = smul.addr %s299, 8
        %s301 = scalar_lea.vmem %s2, %s300
        %p302 = pneg %p83
        %p303 = pneg %p80
        %p304 = scmp.lt.s32.totalorder %s20, 1
        %s305 = scalar_select %p304, %s20, 1
        %s306 = smul.addr %s305, 4
        %s307 = smul.addr %s306, 8
        %s308 = scalar_lea.vmem %s3, %s307
        %p309 = pneg %p109
        %p310 = pneg %p106
        %p311 = scmp.lt.s32.totalorder %s20, 1
        %s312 = scalar_select %p311, %s20, 1
        %s313 = smul.addr %s312, 4
        %s314 = smul.addr %s313, 8
        %s315 = scalar_lea.vmem %s4, %s314
        %p316 = pneg %p135
        %p317 = pneg %p132
        %p318 = scmp.lt.s32.totalorder %s20, 1
        %s319 = scalar_select %p318, %s20, 1
        %s320 = smul.addr %s319, 8
        %s321 = smul.addr %s320, 8
        %s322 = scalar_lea.vmem %s5, %s321
        %p323 = pneg %p161
        %p324 = pneg %p158
        %p325 = scmp.lt.s32.totalorder %s20, 1
        %s326 = scalar_select %p325, %s20, 1
        %s327 = smul.addr %s326, 8
        %s328 = scalar_lea.vmem %s6, %s327
        %p329 = pneg %p187
        %p330 = pneg %p184
        %p331 = pneg %p208
        %p332 = pneg %p205
        %p333 = scmp.lt.s32.totalorder %s20, 1
        %s334 = scalar_select %p333, %s20, 1
        %s335 = smul.addr %s334, 4
        %s336 = smul.addr %s335, 8
        %s337 = scalar_lea.vmem %s2, %s336
        %p338 = scmp.lt.s32.totalorder %s20, 1
        %s339 = scalar_select %p338, %s20, 1
        %s340 = smul.addr %s339, 4
        %s341 = smul.addr %s340, 8
        %s342 = scalar_lea.vmem %s3, %s341
        %p343 = scmp.lt.s32.totalorder %s20, 1
        %s344 = scalar_select %p343, %s20, 1
        %s345 = smul.addr %s344, 4
        %s346 = smul.addr %s345, 8
        %s347 = scalar_lea.vmem %s4, %s346
        %p348 = scmp.lt.s32.totalorder %s20, 1
        %s349 = scalar_select %p348, %s20, 1
        %s350 = smul.addr %s349, 8
        %s351 = smul.addr %s350, 8
        %s352 = scalar_lea.vmem %s5, %s351
        %p353 = scmp.lt.s32.totalorder %s20, 1
        %s354 = scalar_select %p353, %s20, 1
        %s355 = smul.addr %s354, 8
        %s356 = scalar_lea.vmem %s6, %s355
        %p357 = scmp.eq.s32.totalorder %s20, 0
        // Predicated region
        $region53: #{_bert_encoder_impl.1} parent=47 // pred_check
          %p358 = pneg %p357
        $region54: #{_bert_encoder_impl.1} parent=47 // pred_check_branch
          %360 = sbr.rel (%p358) target = $region56
        $region55: #{_bert_encoder_impl.1} parent=47 // pred_region
          %v361 = vld [vmem:[#allocation2] sm:$0xff]
          %v362 = vld [vmem:[#allocation2 + $0x8] sm:$0xff]
          %vm363 = vcmask 261120
          %364 = vst.msk [vmem:[#allocation5] sm:$0xff] %vm363, %v361
          %365 = vst.msk [vmem:[#allocation5 + $0x8] sm:$0xff] %vm363, %v362
        $region56: #{_bert_encoder_impl.1} parent=47 // pred_fallthru
          _
        %v366 = vld [vmem:[#allocation5] sm:$0xff]
        %v367 = vld [vmem:[#allocation5 + $0x8] sm:$0xff]
        %v368 = vld [vmem:[%s356] sm:$0xff]
        %v369 = vld [vmem:[%s337] sm:$0xff]
        %v370 = vld [vmem:[%s337 + $0x8] sm:$0xff]
        %v371 = vld [vmem:[%s337 + $0x10] sm:$0xff]
        %v372 = vld [vmem:[%s337 + $0x18] sm:$0xff]
        %v373 = vlaneseq
        %v374 = vshrl.u32 %v373, 7
        %v375 = vsub.s32 0, %v374
        %v376 = vrot.slane %v368, %v375
        %vm377 = vcmask 261120
        %v379 = vsel %vm377, %v366, 0
        %v382 = vsel %vm377, %v367, 0
        %384 = vmatprep.subr.mxu0 0.0
        %385 = vmatpush1.msra.mxu0 %v369
        %386 = vmatprep.subr.mxu0 0.0
        %387 = vmatpush1.msra.mxu0 %v370
        %388 = vmatprep.subr.mxu0 0.0
        %389 = vmatpush1.msra.mxu0 %v371
        %390 = vmatprep.subr.mxu0 0.0
        %391 = vmatpush1.msra.mxu0 %v372
        %392 = vmatprep.subr.mxu0 0.0
        %393 = vmatpush1.msra.mxu0 0.0
        %394 = vmatprep.subr.mxu0 0.0
        %395 = vmatpush1.msra.mxu0 0.0
        %396 = vmatprep.subr.mxu0 0.0
        %397 = vmatpush1.msra.mxu0 0.0
        %398 = vmatprep.subr.mxu0 0.0
        %399 = vmatpush1.msra.mxu0 0.0
        %400 = vmatprep.subr.mxu0 0.0
        %401 = vmatpush1.msra.mxu0 0.0
        %402 = vmatprep.subr.mxu0 0.0
        %403 = vmatpush1.msra.mxu0 0.0
        %404 = vmatprep.subr.mxu0 0.0
        %405 = vmatpush1.msra.mxu0 0.0
        %406 = vmatprep.subr.mxu0 0.0
        %407 = vmatpush1.msra.mxu0 0.0
        %408 = vmatprep.subr.mxu0 0.0
        %409 = vmatpush1.msra.mxu0 0.0
        %410 = vmatprep.subr.mxu0 0.0
        %411 = vmatpush1.msra.mxu0 0.0
        %412 = vmatprep.subr.mxu0 0.0
        %413 = vmatpush1.msra.mxu0 0.0
        %414 = vmatprep.subr.mxu0 0.0
        %415 = vmatpush1.msra.mxu0 0.0
        %416 = vmatprep.subr.mxu0 0.0
        %417 = vmatpush1.msra.mxu0 0.0
        %418 = vmatprep.subr.mxu0 0.0
        %419 = vmatpush1.msra.mxu0 0.0
        %420 = vmatprep.subr.mxu0 0.0
        %421 = vmatpush1.msra.mxu0 0.0
        %422 = vmatprep.subr.mxu0 0.0
        %423 = vmatpush1.msra.mxu0 0.0
        %424 = vmatprep.subr.mxu0 0.0
        %425 = vmatpush1.msra.mxu0 0.0
        %426 = vmatprep.subr.mxu0 0.0
        %427 = vmatpush1.msra.mxu0 0.0
        %428 = vmatprep.subr.mxu0 0.0
        %429 = vmatpush1.msra.mxu0 0.0
        %430 = vmatprep.subr.mxu0 0.0
        %431 = vmatpush1.msra.mxu0 0.0
        %432 = vmatprep.subr.mxu0 0.0
        %433 = vmatpush1.msra.mxu0 0.0
        %434 = vmatprep.subr.mxu0 0.0
        %435 = vmatpush1.msra.mxu0 0.0
        %436 = vmatprep.subr.mxu0 0.0
        %437 = vmatpush1.msra.mxu0 0.0
        %438 = vmatprep.subr.mxu0 0.0
        %439 = vmatpush1.msra.mxu0 0.0
        %440 = vmatprep.subr.mxu0 0.0
        %441 = vmatpush1.msra.mxu0 0.0
        %442 = vmatprep.subr.mxu0 0.0
        %443 = vmatpush1.msra.mxu0 0.0
        %444 = vmatprep.subr.mxu0 0.0
        %445 = vmatpush1.msra.mxu0 0.0
        %446 = vmatprep.subr.mxu0 0.0
        %447 = vmatpush1.msra.mxu0 0.0
        %448 = vmatprep.mubr.f32.mxu0 0.0
        %449 = vmatmul.mubr.f32.gmra.mrb[0].mxu0 %v379
        %v450 = vpop.f32.mrb[0].mxu0
        %v451 = vadd.f32 %v376, %v450
        %v452 = vpop.f32.mrb[0].mxu0
        %453 = vmatprep.mubr.f32.mxu0 0.0
        %454 = vmatmul.mubr.f32.gmra.mrb[0].mxu0 %v382
        %v455 = vpop.f32.mrb[0].mxu0
        %v456 = vadd.f32 %v376, %v455
        %v457 = vpop.f32.mrb[0].mxu0
        %458 = vdwg.mxu0
        %461 = vrot.lane.b32.xlu0 %v451, 120
        %v462 = vpop.permute.xlu0 %461
        %463 = vrot.lane.b32.xlu0 %v456, 120
        %v464 = vpop.permute.xlu0 %463
        %465 = vrot.lane.b32.xlu0 %v451, 112
        %v466 = vpop.permute.xlu0 %465
        %467 = vrot.lane.b32.xlu0 %v456, 112
        %v468 = vpop.permute.xlu0 %467
        %469 = vrot.lane.b32.xlu0 %v451, 104
        %v470 = vpop.permute.xlu0 %469
        %471 = vrot.lane.b32.xlu0 %v456, 104
        %v472 = vpop.permute.xlu0 %471
        %473 = vrot.lane.b32.xlu0 %v451, 96
        %v474 = vpop.permute.xlu0 %473
        %vm475 = vcmask 64512
        %v476 = vsel %vm475, %v451, 0
        %v478 = vsel %vm475, %v474, 0
        %480 = vmatprep.subr.mxu0 0.0
        %481 = vmatpush1.xpose.msra.mxu0 %v478
        %482 = vmatprep.subr.mxu0 0.0
        %483 = vmatpush1.xpose.msra.mxu0 0.0
        %484 = vmatprep.subr.mxu0 0.0
        %485 = vmatpush1.xpose.msra.mxu0 0.0
        %486 = vmatprep.subr.mxu0 0.0
        %487 = vmatpush1.xpose.msra.mxu0 0.0
        %488 = vmatprep.subr.mxu0 0.0
        %489 = vmatpush1.xpose.msra.mxu0 0.0
        %490 = vmatprep.subr.mxu0 0.0
        %491 = vmatpush1.xpose.msra.mxu0 0.0
        %492 = vmatprep.subr.mxu0 0.0
        %493 = vmatpush1.xpose.msra.mxu0 0.0
        %494 = vmatprep.subr.mxu0 0.0
        %495 = vmatpush1.xpose.msra.mxu0 0.0
        %496 = vmatprep.subr.mxu0 0.0
        %497 = vmatpush1.xpose.msra.mxu0 0.0
        %498 = vmatprep.subr.mxu0 0.0
        %499 = vmatpush1.xpose.msra.mxu0 0.0
        %500 = vmatprep.subr.mxu0 0.0
        %501 = vmatpush1.xpose.msra.mxu0 0.0
        %502 = vmatprep.subr.mxu0 0.0
        %503 = vmatpush1.xpose.msra.mxu0 0.0
        %504 = vmatprep.subr.mxu0 0.0
        %505 = vmatpush1.xpose.msra.mxu0 0.0
        %506 = vmatprep.subr.mxu0 0.0
        %507 = vmatpush1.xpose.msra.mxu0 0.0
        %508 = vmatprep.subr.mxu0 0.0
        %509 = vmatpush1.xpose.msra.mxu0 0.0
        %510 = vmatprep.subr.mxu0 0.0
        %511 = vmatpush1.xpose.msra.mxu0 0.0
        %512 = vmatprep.subr.mxu0 0.0
        %513 = vmatpush1.xpose.msra.mxu0 0.0
        %514 = vmatprep.subr.mxu0 0.0
        %515 = vmatpush1.xpose.msra.mxu0 0.0
        %516 = vmatprep.subr.mxu0 0.0
        %517 = vmatpush1.xpose.msra.mxu0 0.0
        %518 = vmatprep.subr.mxu0 0.0
        %519 = vmatpush1.xpose.msra.mxu0 0.0
        %520 = vmatprep.subr.mxu0 0.0
        %521 = vmatpush1.xpose.msra.mxu0 0.0
        %522 = vmatprep.subr.mxu0 0.0
        %523 = vmatpush1.xpose.msra.mxu0 0.0
        %524 = vmatprep.subr.mxu0 0.0
        %525 = vmatpush1.xpose.msra.mxu0 0.0
        %526 = vmatprep.subr.mxu0 0.0
        %527 = vmatpush1.xpose.msra.mxu0 0.0
        %528 = vmatprep.subr.mxu0 0.0
        %529 = vmatpush1.xpose.msra.mxu0 0.0
        %530 = vmatprep.subr.mxu0 0.0
        %531 = vmatpush1.xpose.msra.mxu0 0.0
        %532 = vmatprep.subr.mxu0 0.0
        %533 = vmatpush1.xpose.msra.mxu0 0.0
        %534 = vmatprep.subr.mxu0 0.0
        %535 = vmatpush1.xpose.msra.mxu0 0.0
        %536 = vmatprep.subr.mxu0 0.0
        %537 = vmatpush1.xpose.msra.mxu0 0.0
        %538 = vmatprep.subr.mxu0 0.0
        %539 = vmatpush1.xpose.msra.mxu0 0.0
        %540 = vmatprep.subr.mxu0 0.0
        %541 = vmatpush1.xpose.msra.mxu0 0.0
        %542 = vmatprep.subr.mxu0 0.0
        %543 = vmatpush1.xpose.msra.mxu0 0.0
        %544 = vmatprep.mubr.f32.mxu0 0.0
        %545 = vmatmul.mubr.f32.gmra.mrb[0].mxu0 %v476
        %v546 = vpop.f32.mrb[0].mxu0
        %v547 = vadd.f32 0.0, %v546
        %v548 = vpop.f32.mrb[0].mxu0
        %549 = vdwg.mxu0
        %550 = vrot.lane.b32.xlu0 %v456, 96
        %v551 = vpop.permute.xlu0 %550
        %v552 = vsel %vm475, %v456, 0
        %v554 = vsel %vm475, %v551, 0
        %556 = vmatprep.subr.mxu0 0.0
        %557 = vmatpush1.xpose.msra.mxu0 %v554
        %558 = vmatprep.subr.mxu0 0.0
        %559 = vmatpush1.xpose.msra.mxu0 0.0
        %560 = vmatprep.subr.mxu0 0.0
        %561 = vmatpush1.xpose.msra.mxu0 0.0
        %562 = vmatprep.subr.mxu0 0.0
        %563 = vmatpush1.xpose.msra.mxu0 0.0
        %564 = vmatprep.subr.mxu0 0.0
        %565 = vmatpush1.xpose.msra.mxu0 0.0
        %566 = vmatprep.subr.mxu0 0.0
        %567 = vmatpush1.xpose.msra.mxu0 0.0
        %568 = vmatprep.subr.mxu0 0.0
        %569 = vmatpush1.xpose.msra.mxu0 0.0
        %570 = vmatprep.subr.mxu0 0.0
        %571 = vmatpush1.xpose.msra.mxu0 0.0
        %572 = vmatprep.subr.mxu0 0.0
        %573 = vmatpush1.xpose.msra.mxu0 0.0
        %574 = vmatprep.subr.mxu0 0.0
        %575 = vmatpush1.xpose.msra.mxu0 0.0
        %576 = vmatprep.subr.mxu0 0.0
        %577 = vmatpush1.xpose.msra.mxu0 0.0
        %578 = vmatprep.subr.mxu0 0.0
        %579 = vmatpush1.xpose.msra.mxu0 0.0
        %580 = vmatprep.subr.mxu0 0.0
        %581 = vmatpush1.xpose.msra.mxu0 0.0
        %582 = vmatprep.subr.mxu0 0.0
        %583 = vmatpush1.xpose.msra.mxu0 0.0
        %584 = vmatprep.subr.mxu0 0.0
        %585 = vmatpush1.xpose.msra.mxu0 0.0
        %586 = vmatprep.subr.mxu0 0.0
        %587 = vmatpush1.xpose.msra.mxu0 0.0
        %588 = vmatprep.subr.mxu0 0.0
        %589 = vmatpush1.xpose.msra.mxu0 0.0
        %590 = vmatprep.subr.mxu0 0.0
        %591 = vmatpush1.xpose.msra.mxu0 0.0
        %592 = vmatprep.subr.mxu0 0.0
        %593 = vmatpush1.xpose.msra.mxu0 0.0
        %594 = vmatprep.subr.mxu0 0.0
        %595 = vmatpush1.xpose.msra.mxu0 0.0
        %596 = vmatprep.subr.mxu0 0.0
        %597 = vmatpush1.xpose.msra.mxu0 0.0
        %598 = vmatprep.subr.mxu0 0.0
        %599 = vmatpush1.xpose.msra.mxu0 0.0
        %600 = vmatprep.subr.mxu0 0.0
        %601 = vmatpush1.xpose.msra.mxu0 0.0
        %602 = vmatprep.subr.mxu0 0.0
        %603 = vmatpush1.xpose.msra.mxu0 0.0
        %604 = vmatprep.subr.mxu0 0.0
        %605 = vmatpush1.xpose.msra.mxu0 0.0
        %606 = vmatprep.subr.mxu0 0.0
        %607 = vmatpush1.xpose.msra.mxu0 0.0
        %608 = vmatprep.subr.mxu0 0.0
        %609 = vmatpush1.xpose.msra.mxu0 0.0
        %610 = vmatprep.subr.mxu0 0.0
        %611 = vmatpush1.xpose.msra.mxu0 0.0
        %612 = vmatprep.subr.mxu0 0.0
        %613 = vmatpush1.xpose.msra.mxu0 0.0
        %614 = vmatprep.subr.mxu0 0.0
        %615 = vmatpush1.xpose.msra.mxu0 0.0
        %616 = vmatprep.subr.mxu0 0.0
        %617 = vmatpush1.xpose.msra.mxu0 0.0
        %618 = vmatprep.subr.mxu0 0.0
        %619 = vmatpush1.xpose.msra.mxu0 0.0
        %620 = vmatprep.mubr.f32.mxu0 0.0
        %621 = vmatmul.mubr.f32.gmra.mrb[0].mxu0 %v552
        %v622 = vpop.f32.mrb[0].mxu0
        %v623 = vadd.f32 0.0, %v622
        %v624 = vpop.f32.mrb[0].mxu0
        %625 = vdwg.mxu0
        %626 = vrot.lane.b32.xlu0 %v462, 96
        %v627 = vpop.permute.xlu0 %626
        %v628 = vsel %vm475, %v462, 0
        %v630 = vsel %vm475, %v627, 0
        %632 = vmatprep.subr.mxu0 0.0
        %633 = vmatpush1.xpose.msra.mxu0 %v630
        %634 = vmatprep.subr.mxu0 0.0
        %635 = vmatpush1.xpose.msra.mxu0 0.0
        %636 = vmatprep.subr.mxu0 0.0
        %637 = vmatpush1.xpose.msra.mxu0 0.0
        %638 = vmatprep.subr.mxu0 0.0
        %639 = vmatpush1.xpose.msra.mxu0 0.0
        %640 = vmatprep.subr.mxu0 0.0
        %641 = vmatpush1.xpose.msra.mxu0 0.0
        %642 = vmatprep.subr.mxu0 0.0
        %643 = vmatpush1.xpose.msra.mxu0 0.0
        %644 = vmatprep.subr.mxu0 0.0
        %645 = vmatpush1.xpose.msra.mxu0 0.0
        %646 = vmatprep.subr.mxu0 0.0
        %647 = vmatpush1.xpose.msra.mxu0 0.0
        %648 = vmatprep.subr.mxu0 0.0
        %649 = vmatpush1.xpose.msra.mxu0 0.0
        %650 = vmatprep.subr.mxu0 0.0
        %651 = vmatpush1.xpose.msra.mxu0 0.0
        %652 = vmatprep.subr.mxu0 0.0
        %653 = vmatpush1.xpose.msra.mxu0 0.0
        %654 = vmatprep.subr.mxu0 0.0
        %655 = vmatpush1.xpose.msra.mxu0 0.0
        %656 = vmatprep.subr.mxu0 0.0
        %657 = vmatpush1.xpose.msra.mxu0 0.0
        %658 = vmatprep.subr.mxu0 0.0
        %659 = vmatpush1.xpose.msra.mxu0 0.0
        %660 = vmatprep.subr.mxu0 0.0
        %661 = vmatpush1.xpose.msra.mxu0 0.0
        %662 = vmatprep.subr.mxu0 0.0
        %663 = vmatpush1.xpose.msra.mxu0 0.0
        %664 = vmatprep.subr.mxu0 0.0
        %665 = vmatpush1.xpose.msra.mxu0 0.0
        %666 = vmatprep.subr.mxu0 0.0
        %667 = vmatpush1.xpose.msra.mxu0 0.0
        %668 = vmatprep.subr.mxu0 0.0
        %669 = vmatpush1.xpose.msra.mxu0 0.0
        %670 = vmatprep.subr.mxu0 0.0
        %671 = vmatpush1.xpose.msra.mxu0 0.0
        %672 = vmatprep.subr.mxu0 0.0
        %673 = vmatpush1.xpose.msra.mxu0 0.0
        %674 = vmatprep.subr.mxu0 0.0
        %675 = vmatpush1.xpose.msra.mxu0 0.0
        %676 = vmatprep.subr.mxu0 0.0
        %677 = vmatpush1.xpose.msra.mxu0 0.0
        %678 = vmatprep.subr.mxu0 0.0
        %679 = vmatpush1.xpose.msra.mxu0 0.0
        %680 = vmatprep.subr.mxu0 0.0
        %681 = vmatpush1.xpose.msra.mxu0 0.0
        %682 = vmatprep.subr.mxu0 0.0
        %683 = vmatpush1.xpose.msra.mxu0 0.0
        %684 = vmatprep.subr.mxu0 0.0
        %685 = vmatpush1.xpose.msra.mxu0 0.0
        %686 = vmatprep.subr.mxu0 0.0
        %687 = vmatpush1.xpose.msra.mxu0 0.0
        %688 = vmatprep.subr.mxu0 0.0
        %689 = vmatpush1.xpose.msra.mxu0 0.0
        %690 = vmatprep.subr.mxu0 0.0
        %691 = vmatpush1.xpose.msra.mxu0 0.0
        %692 = vmatprep.subr.mxu0 0.0
        %693 = vmatpush1.xpose.msra.mxu0 0.0
        %694 = vmatprep.subr.mxu0 0.0
        %695 = vmatpush1.xpose.msra.mxu0 0.0
        %696 = vmatprep.mubr.f32.mxu0 0.0
        %697 = vmatmul.mubr.f32.gmra.mrb[0].mxu0 %v628
        %v698 = vpop.f32.mrb[0].mxu0
        %v699 = vadd.f32 0.0, %v698
        %v700 = vpop.f32.mrb[0].mxu0
        %701 = vdwg.mxu0
        %702 = vrot.lane.b32.xlu0 %v464, 96
        %v703 = vpop.permute.xlu0 %702
        %v704 = vsel %vm475, %v464, 0
        %v706 = vsel %vm475, %v703, 0
        %708 = vmatprep.subr.mxu0 0.0
        %709 = vmatpush1.xpose.msra.mxu0 %v706
        %710 = vmatprep.subr.mxu0 0.0
        %711 = vmatpush1.xpose.msra.mxu0 0.0
        %712 = vmatprep.subr.mxu0 0.0
        %713 = vmatpush1.xpose.msra.mxu0 0.0
        %714 = vmatprep.subr.mxu0 0.0
        %715 = vmatpush1.xpose.msra.mxu0 0.0
        %716 = vmatprep.subr.mxu0 0.0
        %717 = vmatpush1.xpose.msra.mxu0 0.0
        %718 = vmatprep.subr.mxu0 0.0
        %719 = vmatpush1.xpose.msra.mxu0 0.0
        %720 = vmatprep.subr.mxu0 0.0
        %721 = vmatpush1.xpose.msra.mxu0 0.0
        %722 = vmatprep.subr.mxu0 0.0
        %723 = vmatpush1.xpose.msra.mxu0 0.0
        %724 = vmatprep.subr.mxu0 0.0
        %725 = vmatpush1.xpose.msra.mxu0 0.0
        %726 = vmatprep.subr.mxu0 0.0
        %727 = vmatpush1.xpose.msra.mxu0 0.0
        %728 = vmatprep.subr.mxu0 0.0
        %729 = vmatpush1.xpose.msra.mxu0 0.0
        %730 = vmatprep.subr.mxu0 0.0
        %731 = vmatpush1.xpose.msra.mxu0 0.0
        %732 = vmatprep.subr.mxu0 0.0
        %733 = vmatpush1.xpose.msra.mxu0 0.0
        %734 = vmatprep.subr.mxu0 0.0
        %735 = vmatpush1.xpose.msra.mxu0 0.0
        %736 = vmatprep.subr.mxu0 0.0
        %737 = vmatpush1.xpose.msra.mxu0 0.0
        %738 = vmatprep.subr.mxu0 0.0
        %739 = vmatpush1.xpose.msra.mxu0 0.0
        %740 = vmatprep.subr.mxu0 0.0
        %741 = vmatpush1.xpose.msra.mxu0 0.0
        %742 = vmatprep.subr.mxu0 0.0
        %743 = vmatpush1.xpose.msra.mxu0 0.0
        %744 = vmatprep.subr.mxu0 0.0
        %745 = vmatpush1.xpose.msra.mxu0 0.0
        %746 = vmatprep.subr.mxu0 0.0
        %747 = vmatpush1.xpose.msra.mxu0 0.0
        %748 = vmatprep.subr.mxu0 0.0
        %749 = vmatpush1.xpose.msra.mxu0 0.0
        %750 = vmatprep.subr.mxu0 0.0
        %751 = vmatpush1.xpose.msra.mxu0 0.0
        %752 = vmatprep.subr.mxu0 0.0
        %753 = vmatpush1.xpose.msra.mxu0 0.0
        %754 = vmatprep.subr.mxu0 0.0
        %755 = vmatpush1.xpose.msra.mxu0 0.0
        %756 = vmatprep.subr.mxu0 0.0
        %757 = vmatpush1.xpose.msra.mxu0 0.0
        %758 = vmatprep.subr.mxu0 0.0
        %759 = vmatpush1.xpose.msra.mxu0 0.0
        %760 = vmatprep.subr.mxu0 0.0
        %761 = vmatpush1.xpose.msra.mxu0 0.0
        %762 = vmatprep.subr.mxu0 0.0
        %763 = vmatpush1.xpose.msra.mxu0 0.0
        %764 = vmatprep.subr.mxu0 0.0
        %765 = vmatpush1.xpose.msra.mxu0 0.0
        %766 = vmatprep.subr.mxu0 0.0
        %767 = vmatpush1.xpose.msra.mxu0 0.0
        %768 = vmatprep.subr.mxu0 0.0
        %769 = vmatpush1.xpose.msra.mxu0 0.0
        %770 = vmatprep.subr.mxu0 0.0
        %771 = vmatpush1.xpose.msra.mxu0 0.0
        %772 = vmatprep.mubr.f32.mxu0 0.0
        %773 = vmatmul.mubr.f32.gmra.mrb[0].mxu0 %v704
        %v774 = vpop.f32.mrb[0].mxu0
        %v775 = vadd.f32 0.0, %v774
        %v776 = vpop.f32.mrb[0].mxu0
        %777 = vdwg.mxu0
        %778 = vrot.lane.b32.xlu0 %v466, 96
        %v779 = vpop.permute.xlu0 %778
        %v780 = vsel %vm475, %v466, 0
        %v782 = vsel %vm475, %v779, 0
        %784 = vmatprep.subr.mxu0 0.0
        %785 = vmatpush1.xpose.msra.mxu0 %v782
        %786 = vmatprep.subr.mxu0 0.0
        %787 = vmatpush1.xpose.msra.mxu0 0.0
        %788 = vmatprep.subr.mxu0 0.0
        %789 = vmatpush1.xpose.msra.mxu0 0.0
        %790 = vmatprep.subr.mxu0 0.0
        %791 = vmatpush1.xpose.msra.mxu0 0.0
        %792 = vmatprep.subr.mxu0 0.0
        %793 = vmatpush1.xpose.msra.mxu0 0.0
        %794 = vmatprep.subr.mxu0 0.0
        %795 = vmatpush1.xpose.msra.mxu0 0.0
        %796 = vmatprep.subr.mxu0 0.0
        %797 = vmatpush1.xpose.msra.mxu0 0.0
        %798 = vmatprep.subr.mxu0 0.0
        %799 = vmatpush1.xpose.msra.mxu0 0.0
        %800 = vmatprep.subr.mxu0 0.0
        %801 = vmatpush1.xpose.msra.mxu0 0.0
        %802 = vmatprep.subr.mxu0 0.0
        %803 = vmatpush1.xpose.msra.mxu0 0.0
        %804 = vmatprep.subr.mxu0 0.0
        %805 = vmatpush1.xpose.msra.mxu0 0.0
        %806 = vmatprep.subr.mxu0 0.0
        %807 = vmatpush1.xpose.msra.mxu0 0.0
        %808 = vmatprep.subr.mxu0 0.0
        %809 = vmatpush1.xpose.msra.mxu0 0.0
        %810 = vmatprep.subr.mxu0 0.0
        %811 = vmatpush1.xpose.msra.mxu0 0.0
        %812 = vmatprep.subr.mxu0 0.0
        %813 = vmatpush1.xpose.msra.mxu0 0.0
        %814 = vmatprep.subr.mxu0 0.0
        %815 = vmatpush1.xpose.msra.mxu0 0.0
        %816 = vmatprep.subr.mxu0 0.0
        %817 = vmatpush1.xpose.msra.mxu0 0.0
        %818 = vmatprep.subr.mxu0 0.0
        %819 = vmatpush1.xpose.msra.mxu0 0.0
        %820 = vmatprep.subr.mxu0 0.0
        %821 = vmatpush1.xpose.msra.mxu0 0.0
        %822 = vmatprep.subr.mxu0 0.0
        %823 = vmatpush1.xpose.msra.mxu0 0.0
        %824 = vmatprep.subr.mxu0 0.0
        %825 = vmatpush1.xpose.msra.mxu0 0.0
        %826 = vmatprep.subr.mxu0 0.0
        %827 = vmatpush1.xpose.msra.mxu0 0.0
        %828 = vmatprep.subr.mxu0 0.0
        %829 = vmatpush1.xpose.msra.mxu0 0.0
        %830 = vmatprep.subr.mxu0 0.0
        %831 = vmatpush1.xpose.msra.mxu0 0.0
        %832 = vmatprep.subr.mxu0 0.0
        %833 = vmatpush1.xpose.msra.mxu0 0.0
        %834 = vmatprep.subr.mxu0 0.0
        %835 = vmatpush1.xpose.msra.mxu0 0.0
        %836 = vmatprep.subr.mxu0 0.0
        %837 = vmatpush1.xpose.msra.mxu0 0.0
        %838 = vmatprep.subr.mxu0 0.0
        %839 = vmatpush1.xpose.msra.mxu0 0.0
        %840 = vmatprep.subr.mxu0 0.0
        %841 = vmatpush1.xpose.msra.mxu0 0.0
        %842 = vmatprep.subr.mxu0 0.0
        %843 = vmatpush1.xpose.msra.mxu0 0.0
        %844 = vmatprep.subr.mxu0 0.0
        %845 = vmatpush1.xpose.msra.mxu0 0.0
        %846 = vmatprep.subr.mxu0 0.0
        %847 = vmatpush1.xpose.msra.mxu0 0.0
        %848 = vmatprep.mubr.f32.mxu0 0.0
        %849 = vmatmul.mubr.f32.gmra.mrb[0].mxu0 %v780
        %v850 = vpop.f32.mrb[0].mxu0
        %v851 = vadd.f32 0.0, %v850
        %v852 = vpop.f32.mrb[0].mxu0
        %853 = vdwg.mxu0
        %854 = vrot.lane.b32.xlu0 %v468, 96
        %v855 = vpop.permute.xlu0 %854
        %v856 = vsel %vm475, %v468, 0
        %v858 = vsel %vm475, %v855, 0
        %860 = vmatprep.subr.mxu0 0.0
        %861 = vmatpush1.xpose.msra.mxu0 %v858
        %862 = vmatprep.subr.mxu0 0.0
        %863 = vmatpush1.xpose.msra.mxu0 0.0
        %864 = vmatprep.subr.mxu0 0.0
        %865 = vmatpush1.xpose.msra.mxu0 0.0
        %866 = vmatprep.subr.mxu0 0.0
        %867 = vmatpush1.xpose.msra.mxu0 0.0
        %868 = vmatprep.subr.mxu0 0.0
        %869 = vmatpush1.xpose.msra.mxu0 0.0
        %870 = vmatprep.subr.mxu0 0.0
        %871 = vmatpush1.xpose.msra.mxu0 0.0
        %872 = vmatprep.subr.mxu0 0.0
        %873 = vmatpush1.xpose.msra.mxu0 0.0
        %874 = vmatprep.subr.mxu0 0.0
        %875 = vmatpush1.xpose.msra.mxu0 0.0
        %876 = vmatprep.subr.mxu0 0.0
        %877 = vmatpush1.xpose.msra.mxu0 0.0
        %878 = vmatprep.subr.mxu0 0.0
        %879 = vmatpush1.xpose.msra.mxu0 0.0
        %880 = vmatprep.subr.mxu0 0.0
        %881 = vmatpush1.xpose.msra.mxu0 0.0
        %882 = vmatprep.subr.mxu0 0.0
        %883 = vmatpush1.xpose.msra.mxu0 0.0
        %884 = vmatprep.subr.mxu0 0.0
        %885 = vmatpush1.xpose.msra.mxu0 0.0
        %886 = vmatprep.subr.mxu0 0.0
        %887 = vmatpush1.xpose.msra.mxu0 0.0
        %888 = vmatprep.subr.mxu0 0.0
        %889 = vmatpush1.xpose.msra.mxu0 0.0
        %890 = vmatprep.subr.mxu0 0.0
        %891 = vmatpush1.xpose.msra.mxu0 0.0
        %892 = vmatprep.subr.mxu0 0.0
        %893 = vmatpush1.xpose.msra.mxu0 0.0
        %894 = vmatprep.subr.mxu0 0.0
        %895 = vmatpush1.xpose.msra.mxu0 0.0
        %896 = vmatprep.subr.mxu0 0.0
        %897 = vmatpush1.xpose.msra.mxu0 0.0
        %898 = vmatprep.subr.mxu0 0.0
        %899 = vmatpush1.xpose.msra.mxu0 0.0
        %900 = vmatprep.subr.mxu0 0.0
        %901 = vmatpush1.xpose.msra.mxu0 0.0
        %902 = vmatprep.subr.mxu0 0.0
        %903 = vmatpush1.xpose.msra.mxu0 0.0
        %904 = vmatprep.subr.mxu0 0.0
        %905 = vmatpush1.xpose.msra.mxu0 0.0
        %906 = vmatprep.subr.mxu0 0.0
        %907 = vmatpush1.xpose.msra.mxu0 0.0
        %908 = vmatprep.subr.mxu0 0.0
        %909 = vmatpush1.xpose.msra.mxu0 0.0
        %910 = vmatprep.subr.mxu0 0.0
        %911 = vmatpush1.xpose.msra.mxu0 0.0
        %912 = vmatprep.subr.mxu0 0.0
        %913 = vmatpush1.xpose.msra.mxu0 0.0
        %914 = vmatprep.subr.mxu0 0.0
        %915 = vmatpush1.xpose.msra.mxu0 0.0
        %916 = vmatprep.subr.mxu0 0.0
        %917 = vmatpush1.xpose.msra.mxu0 0.0
        %918 = vmatprep.subr.mxu0 0.0
        %919 = vmatpush1.xpose.msra.mxu0 0.0
        %920 = vmatprep.subr.mxu0 0.0
        %921 = vmatpush1.xpose.msra.mxu0 0.0
        %922 = vmatprep.subr.mxu0 0.0
        %923 = vmatpush1.xpose.msra.mxu0 0.0
        %924 = vmatprep.mubr.f32.mxu0 0.0
        %925 = vmatmul.mubr.f32.gmra.mrb[0].mxu0 %v856
        %v926 = vpop.f32.mrb[0].mxu0
        %v927 = vadd.f32 0.0, %v926
        %v928 = vpop.f32.mrb[0].mxu0
        %929 = vdwg.mxu0
        %930 = vrot.lane.b32.xlu0 %v470, 96
        %v931 = vpop.permute.xlu0 %930
        %v932 = vsel %vm475, %v470, 0
        %v934 = vsel %vm475, %v931, 0
        %936 = vmatprep.subr.mxu0 0.0
        %937 = vmatpush1.xpose.msra.mxu0 %v934
        %938 = vmatprep.subr.mxu0 0.0
        %939 = vmatpush1.xpose.msra.mxu0 0.0
        %940 = vmatprep.subr.mxu0 0.0
        %941 = vmatpush1.xpose.msra.mxu0 0.0
        %942 = vmatprep.subr.mxu0 0.0
        %943 = vmatpush1.xpose.msra.mxu0 0.0
        %944 = vmatprep.subr.mxu0 0.0
        %945 = vmatpush1.xpose.msra.mxu0 0.0
        %946 = vmatprep.subr.mxu0 0.0
        %947 = vmatpush1.xpose.msra.mxu0 0.0
        %948 = vmatprep.subr.mxu0 0.0
        %949 = vmatpush1.xpose.msra.mxu0 0.0
        %950 = vmatprep.subr.mxu0 0.0
        %951 = vmatpush1.xpose.msra.mxu0 0.0
        %952 = vmatprep.subr.mxu0 0.0
        %953 = vmatpush1.xpose.msra.mxu0 0.0
        %954 = vmatprep.subr.mxu0 0.0
        %955 = vmatpush1.xpose.msra.mxu0 0.0
        %956 = vmatprep.subr.mxu0 0.0
        %957 = vmatpush1.xpose.msra.mxu0 0.0
        %958 = vmatprep.subr.mxu0 0.0
        %959 = vmatpush1.xpose.msra.mxu0 0.0
        %960 = vmatprep.subr.mxu0 0.0
        %961 = vmatpush1.xpose.msra.mxu0 0.0
        %962 = vmatprep.subr.mxu0 0.0
        %963 = vmatpush1.xpose.msra.mxu0 0.0
        %964 = vmatprep.subr.mxu0 0.0
        %965 = vmatpush1.xpose.msra.mxu0 0.0
        %966 = vmatprep.subr.mxu0 0.0
        %967 = vmatpush1.xpose.msra.mxu0 0.0
        %968 = vmatprep.subr.mxu0 0.0
        %969 = vmatpush1.xpose.msra.mxu0 0.0
        %970 = vmatprep.subr.mxu0 0.0
        %971 = vmatpush1.xpose.msra.mxu0 0.0
        %972 = vmatprep.subr.mxu0 0.0
        %973 = vmatpush1.xpose.msra.mxu0 0.0
        %974 = vmatprep.subr.mxu0 0.0
        %975 = vmatpush1.xpose.msra.mxu0 0.0
        %976 = vmatprep.subr.mxu0 0.0
        %977 = vmatpush1.xpose.msra.mxu0 0.0
        %978 = vmatprep.subr.mxu0 0.0
        %979 = vmatpush1.xpose.msra.mxu0 0.0
        %980 = vmatprep.subr.mxu0 0.0
        %981 = vmatpush1.xpose.msra.mxu0 0.0
        %982 = vmatprep.subr.mxu0 0.0
        %983 = vmatpush1.xpose.msra.mxu0 0.0
        %984 = vmatprep.subr.mxu0 0.0
        %985 = vmatpush1.xpose.msra.mxu0 0.0
        %986 = vmatprep.subr.mxu0 0.0
        %987 = vmatpush1.xpose.msra.mxu0 0.0
        %988 = vmatprep.subr.mxu0 0.0
        %989 = vmatpush1.xpose.msra.mxu0 0.0
        %990 = vmatprep.subr.mxu0 0.0
        %991 = vmatpush1.xpose.msra.mxu0 0.0
        %992 = vmatprep.subr.mxu0 0.0
        %993 = vmatpush1.xpose.msra.mxu0 0.0
        %994 = vmatprep.subr.mxu0 0.0
        %995 = vmatpush1.xpose.msra.mxu0 0.0
        %996 = vmatprep.subr.mxu0 0.0
        %997 = vmatpush1.xpose.msra.mxu0 0.0
        %998 = vmatprep.subr.mxu0 0.0
        %999 = vmatpush1.xpose.msra.mxu0 0.0
        %1000 = vmatprep.mubr.f32.mxu0 0.0
        %1001 = vmatmul.mubr.f32.gmra.mrb[0].mxu0 %v932
        %v1002 = vpop.f32.mrb[0].mxu0
        %v1003 = vadd.f32 0.0, %v1002
        %v1004 = vpop.f32.mrb[0].mxu0
        %1005 = vdwg.mxu0
        %1006 = vrot.lane.b32.xlu0 %v472, 96
        %v1007 = vpop.permute.xlu0 %1006
        %v1008 = vsel %vm475, %v472, 0
        %v1010 = vsel %vm475, %v1007, 0
        %1012 = vmatprep.subr.mxu0 0.0
        %1013 = vmatpush1.xpose.msra.mxu0 %v1010
        %1014 = vmatprep.subr.mxu0 0.0
        %1015 = vmatpush1.xpose.msra.mxu0 0.0
        %1016 = vmatprep.subr.mxu0 0.0
        %1017 = vmatpush1.xpose.msra.mxu0 0.0
        %1018 = vmatprep.subr.mxu0 0.0
        %1019 = vmatpush1.xpose.msra.mxu0 0.0
        %1020 = vmatprep.subr.mxu0 0.0
        %1021 = vmatpush1.xpose.msra.mxu0 0.0
        %1022 = vmatprep.subr.mxu0 0.0
        %1023 = vmatpush1.xpose.msra.mxu0 0.0
        %1024 = vmatprep.subr.mxu0 0.0
        %1025 = vmatpush1.xpose.msra.mxu0 0.0
        %1026 = vmatprep.subr.mxu0 0.0
        %1027 = vmatpush1.xpose.msra.mxu0 0.0
        %1028 = vmatprep.subr.mxu0 0.0
        %1029 = vmatpush1.xpose.msra.mxu0 0.0
        %1030 = vmatprep.subr.mxu0 0.0
        %1031 = vmatpush1.xpose.msra.mxu0 0.0
        %1032 = vmatprep.subr.mxu0 0.0
        %1033 = vmatpush1.xpose.msra.mxu0 0.0
        %1034 = vmatprep.subr.mxu0 0.0
        %1035 = vmatpush1.xpose.msra.mxu0 0.0
        %1036 = vmatprep.subr.mxu0 0.0
        %1037 = vmatpush1.xpose.msra.mxu0 0.0
        %1038 = vmatprep.subr.mxu0 0.0
        %1039 = vmatpush1.xpose.msra.mxu0 0.0
        %1040 = vmatprep.subr.mxu0 0.0
        %1041 = vmatpush1.xpose.msra.mxu0 0.0
        %1042 = vmatprep.subr.mxu0 0.0
        %1043 = vmatpush1.xpose.msra.mxu0 0.0
        %1044 = vmatprep.subr.mxu0 0.0
        %1045 = vmatpush1.xpose.msra.mxu0 0.0
        %1046 = vmatprep.subr.mxu0 0.0
        %1047 = vmatpush1.xpose.msra.mxu0 0.0
        %1048 = vmatprep.subr.mxu0 0.0
        %1049 = vmatpush1.xpose.msra.mxu0 0.0
        %1050 = vmatprep.subr.mxu0 0.0
        %1051 = vmatpush1.xpose.msra.mxu0 0.0
        %1052 = vmatprep.subr.mxu0 0.0
        %1053 = vmatpush1.xpose.msra.mxu0 0.0
        %1054 = vmatprep.subr.mxu0 0.0
        %1055 = vmatpush1.xpose.msra.mxu0 0.0
        %1056 = vmatprep.subr.mxu0 0.0
        %1057 = vmatpush1.xpose.msra.mxu0 0.0
        %1058 = vmatprep.subr.mxu0 0.0
        %1059 = vmatpush1.xpose.msra.mxu0 0.0
        %1060 = vmatprep.subr.mxu0 0.0
        %1061 = vmatpush1.xpose.msra.mxu0 0.0
        %1062 = vmatprep.subr.mxu0 0.0
        %1063 = vmatpush1.xpose.msra.mxu0 0.0
        %1064 = vmatprep.subr.mxu0 0.0
        %1065 = vmatpush1.xpose.msra.mxu0 0.0
        %1066 = vmatprep.subr.mxu0 0.0
        %1067 = vmatpush1.xpose.msra.mxu0 0.0
        %1068 = vmatprep.subr.mxu0 0.0
        %1069 = vmatpush1.xpose.msra.mxu0 0.0
        %1070 = vmatprep.subr.mxu0 0.0
        %1071 = vmatpush1.xpose.msra.mxu0 0.0
        %1072 = vmatprep.subr.mxu0 0.0
        %1073 = vmatpush1.xpose.msra.mxu0 0.0
        %1074 = vmatprep.subr.mxu0 0.0
        %1075 = vmatpush1.xpose.msra.mxu0 0.0
        %1076 = vmatprep.mubr.f32.mxu0 0.0
        %1077 = vmatmul.mubr.f32.gmra.mrb[0].mxu0 %v1008
        %v1078 = vpop.f32.mrb[0].mxu0
        %v1079 = vadd.f32 0.0, %v1078
        %v1080 = vpop.f32.mrb[0].mxu0
        %1081 = vdwg.mxu0
        %v1082 = vld [vmem:[%s0] sm:$0x1]
        %v1083 = vld [vmem:[%s0 + $0x1] sm:$0x1]
        %v1086 = vlaneseq
        %v1087 = vshrl.u32 %v1086, 7
        %v1088 = vsub.s32 0, %v1087
        %v1089 = vrot.slane %v1082, %v1088
        %v1090 = vlaneseq
        %v1091 = vshrl.u32 %v1090, 7
        %v1092 = vsub.s32 0, %v1091
        %v1093 = vrot.slane %v1083, %v1092
        %v1096 = vadd.f32 %v547, %v1089
        %v1097 = vadd.f32 %v623, %v1093
        %v1098 = vadd.f32 %v699, %v1089
        %v1099 = vadd.f32 %v775, %v1093
        %v1100 = vadd.f32 %v851, %v1089
        %v1101 = vadd.f32 %v927, %v1093
        %v1102 = vadd.f32 %v1003, %v1089
        %v1103 = vadd.f32 %v1079, %v1093
        %v1104 = vsel %vm475, %v1096, -inf
        %1105 = vmax.xlane.f32.xlu0 %v1104
        %v1106 = vpop.xlane.xlu0 %1105
        %v1107 = vsel %vm475, %v1097, -inf
        %1108 = vmax.xlane.f32.xlu0 %v1107
        %v1109 = vpop.xlane.xlu0 %1108
        %v1110 = vsel %vm475, %v1098, -inf
        %1111 = vmax.xlane.f32.xlu0 %v1110
        %v1112 = vpop.xlane.xlu0 %1111
        %v1113 = vsel %vm475, %v1099, -inf
        %1114 = vmax.xlane.f32.xlu0 %v1113
        %v1115 = vpop.xlane.xlu0 %1114
        %v1116 = vsel %vm475, %v1100, -inf
        %1117 = vmax.xlane.f32.xlu0 %v1116
        %v1118 = vpop.xlane.xlu0 %1117
        %v1119 = vsel %vm475, %v1101, -inf
        %1120 = vmax.xlane.f32.xlu0 %v1119
        %v1121 = vpop.xlane.xlu0 %1120
        %v1122 = vsel %vm475, %v1102, -inf
        %1123 = vmax.xlane.f32.xlu0 %v1122
        %v1124 = vpop.xlane.xlu0 %1123
        %v1125 = vsel %vm475, %v1103, -inf
        %1126 = vmax.xlane.f32.xlu0 %v1125
        %v1127 = vpop.xlane.xlu0 %1126
        %v1128 = vsub.f32 %v1096, %v1106
        %v1129 = vsub.f32 %v1097, %v1109
        %v1130 = vsub.f32 %v1098, %v1112
        %v1131 = vsub.f32 %v1099, %v1115
        %v1132 = vsub.f32 %v1100, %v1118
        %v1133 = vsub.f32 %v1101, %v1121
        %v1134 = vsub.f32 %v1102, %v1124
        %v1135 = vsub.f32 %v1103, %v1127
        %v1136 = vmul.f32 %v1128, 1.442695
        %v1137 = vpow.pop %v1136
        %v1138 = vmul.f32 %v1129, 1.442695
        %v1139 = vpow.pop %v1138
        %v1140 = vmul.f32 %v1130, 1.442695
        %v1141 = vpow.pop %v1140
        %v1142 = vmul.f32 %v1131, 1.442695
        %v1143 = vpow.pop %v1142
        %v1144 = vmul.f32 %v1132, 1.442695
        %v1145 = vpow.pop %v1144
        %v1146 = vmul.f32 %v1133, 1.442695
        %v1147 = vpow.pop %v1146
        %v1148 = vmul.f32 %v1134, 1.442695
        %v1149 = vpow.pop %v1148
        %v1150 = vmul.f32 %v1135, 1.442695
        %v1151 = vpow.pop %v1150
        %v1152 = vsel %vm475, %v1137, 0.0
        %1153 = vadd.xlane.f32.xlu0 %v1152
        %v1154 = vpop.xlane.xlu0 %1153
        %v1155 = vsel %vm475, %v1139, 0.0
        %1156 = vadd.xlane.f32.xlu0 %v1155
        %v1157 = vpop.xlane.xlu0 %1156
        %v1158 = vsel %vm475, %v1141, 0.0
        %1159 = vadd.xlane.f32.xlu0 %v1158
        %v1160 = vpop.xlane.xlu0 %1159
        %v1161 = vsel %vm475, %v1143, 0.0
        %1162 = vadd.xlane.f32.xlu0 %v1161
        %v1163 = vpop.xlane.xlu0 %1162
        %v1164 = vsel %vm475, %v1145, 0.0
        %1165 = vadd.xlane.f32.xlu0 %v1164
        %v1166 = vpop.xlane.xlu0 %1165
        %v1167 = vsel %vm475, %v1147, 0.0
        %1168 = vadd.xlane.f32.xlu0 %v1167
        %v1169 = vpop.xlane.xlu0 %1168
        %v1170 = vsel %vm475, %v1149, 0.0
        %1171 = vadd.xlane.f32.xlu0 %v1170
        %v1172 = vpop.xlane.xlu0 %1171
        %v1173 = vsel %vm475, %v1151, 0.0
        %1174 = vadd.xlane.f32.xlu0 %v1173
        %v1175 = vpop.xlane.xlu0 %1174
        %v1176 = vrcp.pop %v1154
        %v1177 = vmul.f32 1.0, %v1176
        %v1178 = vrcp.pop %v1157
        %v1179 = vmul.f32 1.0, %v1178
        %v1180 = vrcp.pop %v1160
        %v1181 = vmul.f32 1.0, %v1180
        %v1182 = vrcp.pop %v1163
        %v1183 = vmul.f32 1.0, %v1182
        %v1184 = vrcp.pop %v1166
        %v1185 = vmul.f32 1.0, %v1184
        %v1186 = vrcp.pop %v1169
        %v1187 = vmul.f32 1.0, %v1186
        %v1188 = vrcp.pop %v1172
        %v1189 = vmul.f32 1.0, %v1188
        %v1190 = vrcp.pop %v1175
        %v1191 = vmul.f32 1.0, %v1190
        %v1192 = vmul.f32 %v1137, %v1177
        %v1193 = vmul.f32 %v1139, %v1179
        %v1194 = vmul.f32 %v1141, %v1181
        %v1195 = vmul.f32 %v1143, %v1183
        %v1196 = vmul.f32 %v1145, %v1185
        %v1197 = vmul.f32 %v1147, %v1187
        %v1198 = vmul.f32 %v1149, %v1189
        %v1199 = vmul.f32 %v1151, %v1191
        %1200 = vrot.lane.b32.xlu0 %v451, 64
        %v1201 = vpop.permute.xlu0 %1200
        %v1204 = vsel %vm475, %v1192, 0
        %1206 = vmatprep.subr.mxu0 0.0
        %1207 = vmatpush1.msra.mxu0 %v1201
        %1208 = vmatprep.subr.mxu0 0.0
        %1209 = vmatpush1.msra.mxu0 0.0
        %1210 = vmatprep.subr.mxu0 0.0
        %1211 = vmatpush1.msra.mxu0 0.0
        %1212 = vmatprep.subr.mxu0 0.0
        %1213 = vmatpush1.msra.mxu0 0.0
        %1214 = vmatprep.subr.mxu0 0.0
        %1215 = vmatpush1.msra.mxu0 0.0
        %1216 = vmatprep.subr.mxu0 0.0
        %1217 = vmatpush1.msra.mxu0 0.0
        %1218 = vmatprep.subr.mxu0 0.0
        %1219 = vmatpush1.msra.mxu0 0.0
        %1220 = vmatprep.subr.mxu0 0.0
        %1221 = vmatpush1.msra.mxu0 0.0
        %1222 = vmatprep.subr.mxu0 0.0
        %1223 = vmatpush1.msra.mxu0 0.0
        %1224 = vmatprep.subr.mxu0 0.0
        %1225 = vmatpush1.msra.mxu0 0.0
        %1226 = vmatprep.subr.mxu0 0.0
        %1227 = vmatpush1.msra.mxu0 0.0
        %1228 = vmatprep.subr.mxu0 0.0
        %1229 = vmatpush1.msra.mxu0 0.0
        %1230 = vmatprep.subr.mxu0 0.0
        %1231 = vmatpush1.msra.mxu0 0.0
        %1232 = vmatprep.subr.mxu0 0.0
        %1233 = vmatpush1.msra.mxu0 0.0
        %1234 = vmatprep.subr.mxu0 0.0
        %1235 = vmatpush1.msra.mxu0 0.0
        %1236 = vmatprep.subr.mxu0 0.0
        %1237 = vmatpush1.msra.mxu0 0.0
        %1238 = vmatprep.subr.mxu0 0.0
        %1239 = vmatpush1.msra.mxu0 0.0
        %1240 = vmatprep.subr.mxu0 0.0
        %1241 = vmatpush1.msra.mxu0 0.0
        %1242 = vmatprep.subr.mxu0 0.0
        %1243 = vmatpush1.msra.mxu0 0.0
        %1244 = vmatprep.subr.mxu0 0.0
        %1245 = vmatpush1.msra.mxu0 0.0
        %1246 = vmatprep.subr.mxu0 0.0
        %1247 = vmatpush1.msra.mxu0 0.0
        %1248 = vmatprep.subr.mxu0 0.0
        %1249 = vmatpush1.msra.mxu0 0.0
        %1250 = vmatprep.subr.mxu0 0.0
        %1251 = vmatpush1.msra.mxu0 0.0
        %1252 = vmatprep.subr.mxu0 0.0
        %1253 = vmatpush1.msra.mxu0 0.0
        %1254 = vmatprep.subr.mxu0 0.0
        %1255 = vmatpush1.msra.mxu0 0.0
        %1256 = vmatprep.subr.mxu0 0.0
        %1257 = vmatpush1.msra.mxu0 0.0
        %1258 = vmatprep.subr.mxu0 0.0
        %1259 = vmatpush1.msra.mxu0 0.0
        %1260 = vmatprep.subr.mxu0 0.0
        %1261 = vmatpush1.msra.mxu0 0.0
        %1262 = vmatprep.subr.mxu0 0.0
        %1263 = vmatpush1.msra.mxu0 0.0
        %1264 = vmatprep.subr.mxu0 0.0
        %1265 = vmatpush1.msra.mxu0 0.0
        %1266 = vmatprep.subr.mxu0 0.0
        %1267 = vmatpush1.msra.mxu0 0.0
        %1268 = vmatprep.subr.mxu0 0.0
        %1269 = vmatpush1.msra.mxu0 0.0
        %1270 = vmatprep.mubr.f32.mxu0 0.0
        %1271 = vmatmul.mubr.f32.gmra.mrb[0].mxu0 %v1204
        %v1272 = vpop.f32.mrb[0].mxu0
        %v1273 = vadd.f32 0.0, %v1272
        %v1274 = vpop.f32.mrb[0].mxu0
        %1275 = vdwg.mxu0
        %1276 = vrot.lane.b32.xlu0 %v456, 64
        %v1277 = vpop.permute.xlu0 %1276
        %v1280 = vsel %vm475, %v1193, 0
        %1282 = vmatprep.subr.mxu0 0.0
        %1283 = vmatpush1.msra.mxu0 %v1277
        %1284 = vmatprep.subr.mxu0 0.0
        %1285 = vmatpush1.msra.mxu0 0.0
        %1286 = vmatprep.subr.mxu0 0.0
        %1287 = vmatpush1.msra.mxu0 0.0
        %1288 = vmatprep.subr.mxu0 0.0
        %1289 = vmatpush1.msra.mxu0 0.0
        %1290 = vmatprep.subr.mxu0 0.0
        %1291 = vmatpush1.msra.mxu0 0.0
        %1292 = vmatprep.subr.mxu0 0.0
        %1293 = vmatpush1.msra.mxu0 0.0
        %1294 = vmatprep.subr.mxu0 0.0
        %1295 = vmatpush1.msra.mxu0 0.0
        %1296 = vmatprep.subr.mxu0 0.0
        %1297 = vmatpush1.msra.mxu0 0.0
        %1298 = vmatprep.subr.mxu0 0.0
        %1299 = vmatpush1.msra.mxu0 0.0
        %1300 = vmatprep.subr.mxu0 0.0
        %1301 = vmatpush1.msra.mxu0 0.0
        %1302 = vmatprep.subr.mxu0 0.0
        %1303 = vmatpush1.msra.mxu0 0.0
        %1304 = vmatprep.subr.mxu0 0.0
        %1305 = vmatpush1.msra.mxu0 0.0
        %1306 = vmatprep.subr.mxu0 0.0
        %1307 = vmatpush1.msra.mxu0 0.0
        %1308 = vmatprep.subr.mxu0 0.0
        %1309 = vmatpush1.msra.mxu0 0.0
        %1310 = vmatprep.subr.mxu0 0.0
        %1311 = vmatpush1.msra.mxu0 0.0
        %1312 = vmatprep.subr.mxu0 0.0
        %1313 = vmatpush1.msra.mxu0 0.0
        %1314 = vmatprep.subr.mxu0 0.0
        %1315 = vmatpush1.msra.mxu0 0.0
        %1316 = vmatprep.subr.mxu0 0.0
        %1317 = vmatpush1.msra.mxu0 0.0
        %1318 = vmatprep.subr.mxu0 0.0
        %1319 = vmatpush1.msra.mxu0 0.0
        %1320 = vmatprep.subr.mxu0 0.0
        %1321 = vmatpush1.msra.mxu0 0.0
        %1322 = vmatprep.subr.mxu0 0.0
        %1323 = vmatpush1.msra.mxu0 0.0
        %1324 = vmatprep.subr.mxu0 0.0
        %1325 = vmatpush1.msra.mxu0 0.0
        %1326 = vmatprep.subr.mxu0 0.0
        %1327 = vmatpush1.msra.mxu0 0.0
        %1328 = vmatprep.subr.mxu0 0.0
        %1329 = vmatpush1.msra.mxu0 0.0
        %1330 = vmatprep.subr.mxu0 0.0
        %1331 = vmatpush1.msra.mxu0 0.0
        %1332 = vmatprep.subr.mxu0 0.0
        %1333 = vmatpush1.msra.mxu0 0.0
        %1334 = vmatprep.subr.mxu0 0.0
        %1335 = vmatpush1.msra.mxu0 0.0
        %1336 = vmatprep.subr.mxu0 0.0
        %1337 = vmatpush1.msra.mxu0 0.0
        %1338 = vmatprep.subr.mxu0 0.0
        %1339 = vmatpush1.msra.mxu0 0.0
        %1340 = vmatprep.subr.mxu0 0.0
        %1341 = vmatpush1.msra.mxu0 0.0
        %1342 = vmatprep.subr.mxu0 0.0
        %1343 = vmatpush1.msra.mxu0 0.0
        %1344 = vmatprep.subr.mxu0 0.0
        %1345 = vmatpush1.msra.mxu0 0.0
        %1346 = vmatprep.mubr.f32.mxu0 0.0
        %1347 = vmatmul.mubr.f32.gmra.mrb[0].mxu0 %v1280
        %v1348 = vpop.f32.mrb[0].mxu0
        %v1349 = vadd.f32 0.0, %v1348
        %v1350 = vpop.f32.mrb[0].mxu0
        %1351 = vdwg.mxu0
        %1352 = vrot.lane.b32.xlu0 %v462, 64
        %v1353 = vpop.permute.xlu0 %1352
        %v1356 = vsel %vm475, %v1194, 0
        %1358 = vmatprep.subr.mxu0 0.0
        %1359 = vmatpush1.msra.mxu0 %v1353
        %1360 = vmatprep.subr.mxu0 0.0
        %1361 = vmatpush1.msra.mxu0 0.0
        %1362 = vmatprep.subr.mxu0 0.0
        %1363 = vmatpush1.msra.mxu0 0.0
        %1364 = vmatprep.subr.mxu0 0.0
        %1365 = vmatpush1.msra.mxu0 0.0
        %1366 = vmatprep.subr.mxu0 0.0
        %1367 = vmatpush1.msra.mxu0 0.0
        %1368 = vmatprep.subr.mxu0 0.0
        %1369 = vmatpush1.msra.mxu0 0.0
        %1370 = vmatprep.subr.mxu0 0.0
        %1371 = vmatpush1.msra.mxu0 0.0
        %1372 = vmatprep.subr.mxu0 0.0
        %1373 = vmatpush1.msra.mxu0 0.0
        %1374 = vmatprep.subr.mxu0 0.0
        %1375 = vmatpush1.msra.mxu0 0.0
        %1376 = vmatprep.subr.mxu0 0.0
        %1377 = vmatpush1.msra.mxu0 0.0
        %1378 = vmatprep.subr.mxu0 0.0
        %1379 = vmatpush1.msra.mxu0 0.0
        %1380 = vmatprep.subr.mxu0 0.0
        %1381 = vmatpush1.msra.mxu0 0.0
        %1382 = vmatprep.subr.mxu0 0.0
        %1383 = vmatpush1.msra.mxu0 0.0
        %1384 = vmatprep.subr.mxu0 0.0
        %1385 = vmatpush1.msra.mxu0 0.0
        %1386 = vmatprep.subr.mxu0 0.0
        %1387 = vmatpush1.msra.mxu0 0.0
        %1388 = vmatprep.subr.mxu0 0.0
        %1389 = vmatpush1.msra.mxu0 0.0
        %1390 = vmatprep.subr.mxu0 0.0
        %1391 = vmatpush1.msra.mxu0 0.0
        %1392 = vmatprep.subr.mxu0 0.0
        %1393 = vmatpush1.msra.mxu0 0.0
        %1394 = vmatprep.subr.mxu0 0.0
        %1395 = vmatpush1.msra.mxu0 0.0
        %1396 = vmatprep.subr.mxu0 0.0
        %1397 = vmatpush1.msra.mxu0 0.0
        %1398 = vmatprep.subr.mxu0 0.0
        %1399 = vmatpush1.msra.mxu0 0.0
        %1400 = vmatprep.subr.mxu0 0.0
        %1401 = vmatpush1.msra.mxu0 0.0
        %1402 = vmatprep.subr.mxu0 0.0
        %1403 = vmatpush1.msra.mxu0 0.0
        %1404 = vmatprep.subr.mxu0 0.0
        %1405 = vmatpush1.msra.mxu0 0.0
        %1406 = vmatprep.subr.mxu0 0.0
        %1407 = vmatpush1.msra.mxu0 0.0
        %1408 = vmatprep.subr.mxu0 0.0
        %1409 = vmatpush1.msra.mxu0 0.0
        %1410 = vmatprep.subr.mxu0 0.0
        %1411 = vmatpush1.msra.mxu0 0.0
        %1412 = vmatprep.subr.mxu0 0.0
        %1413 = vmatpush1.msra.mxu0 0.0
        %1414 = vmatprep.subr.mxu0 0.0
        %1415 = vmatpush1.msra.mxu0 0.0
        %1416 = vmatprep.subr.mxu0 0.0
        %1417 = vmatpush1.msra.mxu0 0.0
        %1418 = vmatprep.subr.mxu0 0.0
        %1419 = vmatpush1.msra.mxu0 0.0
        %1420 = vmatprep.subr.mxu0 0.0
        %1421 = vmatpush1.msra.mxu0 0.0
        %1422 = vmatprep.mubr.f32.mxu0 0.0
        %1423 = vmatmul.mubr.f32.gmra.mrb[0].mxu0 %v1356
        %v1424 = vpop.f32.mrb[0].mxu0
        %v1425 = vadd.f32 0.0, %v1424
        %v1426 = vpop.f32.mrb[0].mxu0
        %1427 = vdwg.mxu0
        %1428 = vrot.lane.b32.xlu0 %v464, 64
        %v1429 = vpop.permute.xlu0 %1428
        %v1432 = vsel %vm475, %v1195, 0
        %1434 = vmatprep.subr.mxu0 0.0
        %1435 = vmatpush1.msra.mxu0 %v1429
        %1436 = vmatprep.subr.mxu0 0.0
        %1437 = vmatpush1.msra.mxu0 0.0
        %1438 = vmatprep.subr.mxu0 0.0
        %1439 = vmatpush1.msra.mxu0 0.0
        %1440 = vmatprep.subr.mxu0 0.0
        %1441 = vmatpush1.msra.mxu0 0.0
        %1442 = vmatprep.subr.mxu0 0.0
        %1443 = vmatpush1.msra.mxu0 0.0
        %1444 = vmatprep.subr.mxu0 0.0
        %1445 = vmatpush1.msra.mxu0 0.0
        %1446 = vmatprep.subr.mxu0 0.0
        %1447 = vmatpush1.msra.mxu0 0.0
        %1448 = vmatprep.subr.mxu0 0.0
        %1449 = vmatpush1.msra.mxu0 0.0
        %1450 = vmatprep.subr.mxu0 0.0
        %1451 = vmatpush1.msra.mxu0 0.0
        %1452 = vmatprep.subr.mxu0 0.0
        %1453 = vmatpush1.msra.mxu0 0.0
        %1454 = vmatprep.subr.mxu0 0.0
        %1455 = vmatpush1.msra.mxu0 0.0
        %1456 = vmatprep.subr.mxu0 0.0
        %1457 = vmatpush1.msra.mxu0 0.0
        %1458 = vmatprep.subr.mxu0 0.0
        %1459 = vmatpush1.msra.mxu0 0.0
        %1460 = vmatprep.subr.mxu0 0.0
        %1461 = vmatpush1.msra.mxu0 0.0
        %1462 = vmatprep.subr.mxu0 0.0
        %1463 = vmatpush1.msra.mxu0 0.0
        %1464 = vmatprep.subr.mxu0 0.0
        %1465 = vmatpush1.msra.mxu0 0.0
        %1466 = vmatprep.subr.mxu0 0.0
        %1467 = vmatpush1.msra.mxu0 0.0
        %1468 = vmatprep.subr.mxu0 0.0
        %1469 = vmatpush1.msra.mxu0 0.0
        %1470 = vmatprep.subr.mxu0 0.0
        %1471 = vmatpush1.msra.mxu0 0.0
        %1472 = vmatprep.subr.mxu0 0.0
        %1473 = vmatpush1.msra.mxu0 0.0
        %1474 = vmatprep.subr.mxu0 0.0
        %1475 = vmatpush1.msra.mxu0 0.0
        %1476 = vmatprep.subr.mxu0 0.0
        %1477 = vmatpush1.msra.mxu0 0.0
        %1478 = vmatprep.subr.mxu0 0.0
        %1479 = vmatpush1.msra.mxu0 0.0
        %1480 = vmatprep.subr.mxu0 0.0
        %1481 = vmatpush1.msra.mxu0 0.0
        %1482 = vmatprep.subr.mxu0 0.0
        %1483 = vmatpush1.msra.mxu0 0.0
        %1484 = vmatprep.subr.mxu0 0.0
        %1485 = vmatpush1.msra.mxu0 0.0
        %1486 = vmatprep.subr.mxu0 0.0
        %1487 = vmatpush1.msra.mxu0 0.0
        %1488 = vmatprep.subr.mxu0 0.0
        %1489 = vmatpush1.msra.mxu0 0.0
        %1490 = vmatprep.subr.mxu0 0.0
        %1491 = vmatpush1.msra.mxu0 0.0
        %1492 = vmatprep.subr.mxu0 0.0
        %1493 = vmatpush1.msra.mxu0 0.0
        %1494 = vmatprep.subr.mxu0 0.0
        %1495 = vmatpush1.msra.mxu0 0.0
        %1496 = vmatprep.subr.mxu0 0.0
        %1497 = vmatpush1.msra.mxu0 0.0
        %1498 = vmatprep.mubr.f32.mxu0 0.0
        %1499 = vmatmul.mubr.f32.gmra.mrb[0].mxu0 %v1432
        %v1500 = vpop.f32.mrb[0].mxu0
        %v1501 = vadd.f32 0.0, %v1500
        %v1502 = vpop.f32.mrb[0].mxu0
        %1503 = vdwg.mxu0
        %1504 = vrot.lane.b32.xlu0 %v466, 64
        %v1505 = vpop.permute.xlu0 %1504
        %v1508 = vsel %vm475, %v1196, 0
        %1510 = vmatprep.subr.mxu0 0.0
        %1511 = vmatpush1.msra.mxu0 %v1505
        %1512 = vmatprep.subr.mxu0 0.0
        %1513 = vmatpush1.msra.mxu0 0.0
        %1514 = vmatprep.subr.mxu0 0.0
        %1515 = vmatpush1.msra.mxu0 0.0
        %1516 = vmatprep.subr.mxu0 0.0
        %1517 = vmatpush1.msra.mxu0 0.0
        %1518 = vmatprep.subr.mxu0 0.0
        %1519 = vmatpush1.msra.mxu0 0.0
        %1520 = vmatprep.subr.mxu0 0.0
        %1521 = vmatpush1.msra.mxu0 0.0
        %1522 = vmatprep.subr.mxu0 0.0
        %1523 = vmatpush1.msra.mxu0 0.0
        %1524 = vmatprep.subr.mxu0 0.0
        %1525 = vmatpush1.msra.mxu0 0.0
        %1526 = vmatprep.subr.mxu0 0.0
        %1527 = vmatpush1.msra.mxu0 0.0
        %1528 = vmatprep.subr.mxu0 0.0
        %1529 = vmatpush1.msra.mxu0 0.0
        %1530 = vmatprep.subr.mxu0 0.0
        %1531 = vmatpush1.msra.mxu0 0.0
        %1532 = vmatprep.subr.mxu0 0.0
        %1533 = vmatpush1.msra.mxu0 0.0
        %1534 = vmatprep.subr.mxu0 0.0
        %1535 = vmatpush1.msra.mxu0 0.0
        %1536 = vmatprep.subr.mxu0 0.0
        %1537 = vmatpush1.msra.mxu0 0.0
        %1538 = vmatprep.subr.mxu0 0.0
        %1539 = vmatpush1.msra.mxu0 0.0
        %1540 = vmatprep.subr.mxu0 0.0
        %1541 = vmatpush1.msra.mxu0 0.0
        %1542 = vmatprep.subr.mxu0 0.0
        %1543 = vmatpush1.msra.mxu0 0.0
        %1544 = vmatprep.subr.mxu0 0.0
        %1545 = vmatpush1.msra.mxu0 0.0
        %1546 = vmatprep.subr.mxu0 0.0
        %1547 = vmatpush1.msra.mxu0 0.0
        %1548 = vmatprep.subr.mxu0 0.0
        %1549 = vmatpush1.msra.mxu0 0.0
        %1550 = vmatprep.subr.mxu0 0.0
        %1551 = vmatpush1.msra.mxu0 0.0
        %1552 = vmatprep.subr.mxu0 0.0
        %1553 = vmatpush1.msra.mxu0 0.0
        %1554 = vmatprep.subr.mxu0 0.0
        %1555 = vmatpush1.msra.mxu0 0.0
        %1556 = vmatprep.subr.mxu0 0.0
        %1557 = vmatpush1.msra.mxu0 0.0
        %1558 = vmatprep.subr.mxu0 0.0
        %1559 = vmatpush1.msra.mxu0 0.0
        %1560 = vmatprep.subr.mxu0 0.0
        %1561 = vmatpush1.msra.mxu0 0.0
        %1562 = vmatprep.subr.mxu0 0.0
        %1563 = vmatpush1.msra.mxu0 0.0
        %1564 = vmatprep.subr.mxu0 0.0
        %1565 = vmatpush1.msra.mxu0 0.0
        %1566 = vmatprep.subr.mxu0 0.0
        %1567 = vmatpush1.msra.mxu0 0.0
        %1568 = vmatprep.subr.mxu0 0.0
        %1569 = vmatpush1.msra.mxu0 0.0
        %1570 = vmatprep.subr.mxu0 0.0
        %1571 = vmatpush1.msra.mxu0 0.0
        %1572 = vmatprep.subr.mxu0 0.0
        %1573 = vmatpush1.msra.mxu0 0.0
        %1574 = vmatprep.mubr.f32.mxu0 0.0
        %1575 = vmatmul.mubr.f32.gmra.mrb[0].mxu0 %v1508
        %v1576 = vpop.f32.mrb[0].mxu0
        %v1577 = vadd.f32 0.0, %v1576
        %v1578 = vpop.f32.mrb[0].mxu0
        %1579 = vdwg.mxu0
        %1580 = vrot.lane.b32.xlu0 %v468, 64
        %v1581 = vpop.permute.xlu0 %1580
        %v1584 = vsel %vm475, %v1197, 0
        %1586 = vmatprep.subr.mxu0 0.0
        %1587 = vmatpush1.msra.mxu0 %v1581
        %1588 = vmatprep.subr.mxu0 0.0
        %1589 = vmatpush1.msra.mxu0 0.0
        %1590 = vmatprep.subr.mxu0 0.0
        %1591 = vmatpush1.msra.mxu0 0.0
        %1592 = vmatprep.subr.mxu0 0.0
        %1593 = vmatpush1.msra.mxu0 0.0
        %1594 = vmatprep.subr.mxu0 0.0
        %1595 = vmatpush1.msra.mxu0 0.0
        %1596 = vmatprep.subr.mxu0 0.0
        %1597 = vmatpush1.msra.mxu0 0.0
        %1598 = vmatprep.subr.mxu0 0.0
        %1599 = vmatpush1.msra.mxu0 0.0
        %1600 = vmatprep.subr.mxu0 0.0
        %1601 = vmatpush1.msra.mxu0 0.0
        %1602 = vmatprep.subr.mxu0 0.0
        %1603 = vmatpush1.msra.mxu0 0.0
        %1604 = vmatprep.subr.mxu0 0.0
        %1605 = vmatpush1.msra.mxu0 0.0
        %1606 = vmatprep.subr.mxu0 0.0
        %1607 = vmatpush1.msra.mxu0 0.0
        %1608 = vmatprep.subr.mxu0 0.0
        %1609 = vmatpush1.msra.mxu0 0.0
        %1610 = vmatprep.subr.mxu0 0.0
        %1611 = vmatpush1.msra.mxu0 0.0
        %1612 = vmatprep.subr.mxu0 0.0
        %1613 = vmatpush1.msra.mxu0 0.0
        %1614 = vmatprep.subr.mxu0 0.0
        %1615 = vmatpush1.msra.mxu0 0.0
        %1616 = vmatprep.subr.mxu0 0.0
        %1617 = vmatpush1.msra.mxu0 0.0
        %1618 = vmatprep.subr.mxu0 0.0
        %1619 = vmatpush1.msra.mxu0 0.0
        %1620 = vmatprep.subr.mxu0 0.0
        %1621 = vmatpush1.msra.mxu0 0.0
        %1622 = vmatprep.subr.mxu0 0.0
        %1623 = vmatpush1.msra.mxu0 0.0
        %1624 = vmatprep.subr.mxu0 0.0
        %1625 = vmatpush1.msra.mxu0 0.0
        %1626 = vmatprep.subr.mxu0 0.0
        %1627 = vmatpush1.msra.mxu0 0.0
        %1628 = vmatprep.subr.mxu0 0.0
        %1629 = vmatpush1.msra.mxu0 0.0
        %1630 = vmatprep.subr.mxu0 0.0
        %1631 = vmatpush1.msra.mxu0 0.0
        %1632 = vmatprep.subr.mxu0 0.0
        %1633 = vmatpush1.msra.mxu0 0.0
        %1634 = vmatprep.subr.mxu0 0.0
        %1635 = vmatpush1.msra.mxu0 0.0
        %1636 = vmatprep.subr.mxu0 0.0
        %1637 = vmatpush1.msra.mxu0 0.0
        %1638 = vmatprep.subr.mxu0 0.0
        %1639 = vmatpush1.msra.mxu0 0.0
        %1640 = vmatprep.subr.mxu0 0.0
        %1641 = vmatpush1.msra.mxu0 0.0
        %1642 = vmatprep.subr.mxu0 0.0
        %1643 = vmatpush1.msra.mxu0 0.0
        %1644 = vmatprep.subr.mxu0 0.0
        %1645 = vmatpush1.msra.mxu0 0.0
        %1646 = vmatprep.subr.mxu0 0.0
        %1647 = vmatpush1.msra.mxu0 0.0
        %1648 = vmatprep.subr.mxu0 0.0
        %1649 = vmatpush1.msra.mxu0 0.0
        %1650 = vmatprep.mubr.f32.mxu0 0.0
        %1651 = vmatmul.mubr.f32.gmra.mrb[0].mxu0 %v1584
        %v1652 = vpop.f32.mrb[0].mxu0
        %v1653 = vadd.f32 0.0, %v1652
        %v1654 = vpop.f32.mrb[0].mxu0
        %1655 = vdwg.mxu0
        %1656 = vrot.lane.b32.xlu0 %v470, 64
        %v1657 = vpop.permute.xlu0 %1656
        %v1660 = vsel %vm475, %v1198, 0
        %1662 = vmatprep.subr.mxu0 0.0
        %1663 = vmatpush1.msra.mxu0 %v1657
        %1664 = vmatprep.subr.mxu0 0.0
        %1665 = vmatpush1.msra.mxu0 0.0
        %1666 = vmatprep.subr.mxu0 0.0
        %1667 = vmatpush1.msra.mxu0 0.0
        %1668 = vmatprep.subr.mxu0 0.0
        %1669 = vmatpush1.msra.mxu0 0.0
        %1670 = vmatprep.subr.mxu0 0.0
        %1671 = vmatpush1.msra.mxu0 0.0
        %1672 = vmatprep.subr.mxu0 0.0
        %1673 = vmatpush1.msra.mxu0 0.0
        %1674 = vmatprep.subr.mxu0 0.0
        %1675 = vmatpush1.msra.mxu0 0.0
        %1676 = vmatprep.subr.mxu0 0.0
        %1677 = vmatpush1.msra.mxu0 0.0
        %1678 = vmatprep.subr.mxu0 0.0
        %1679 = vmatpush1.msra.mxu0 0.0
        %1680 = vmatprep.subr.mxu0 0.0
        %1681 = vmatpush1.msra.mxu0 0.0
        %1682 = vmatprep.subr.mxu0 0.0
        %1683 = vmatpush1.msra.mxu0 0.0
        %1684 = vmatprep.subr.mxu0 0.0
        %1685 = vmatpush1.msra.mxu0 0.0
        %1686 = vmatprep.subr.mxu0 0.0
        %1687 = vmatpush1.msra.mxu0 0.0
        %1688 = vmatprep.subr.mxu0 0.0
        %1689 = vmatpush1.msra.mxu0 0.0
        %1690 = vmatprep.subr.mxu0 0.0
        %1691 = vmatpush1.msra.mxu0 0.0
        %1692 = vmatprep.subr.mxu0 0.0
        %1693 = vmatpush1.msra.mxu0 0.0
        %1694 = vmatprep.subr.mxu0 0.0
        %1695 = vmatpush1.msra.mxu0 0.0
        %1696 = vmatprep.subr.mxu0 0.0
        %1697 = vmatpush1.msra.mxu0 0.0
        %1698 = vmatprep.subr.mxu0 0.0
        %1699 = vmatpush1.msra.mxu0 0.0
        %1700 = vmatprep.subr.mxu0 0.0
        %1701 = vmatpush1.msra.mxu0 0.0
        %1702 = vmatprep.subr.mxu0 0.0
        %1703 = vmatpush1.msra.mxu0 0.0
        %1704 = vmatprep.subr.mxu0 0.0
        %1705 = vmatpush1.msra.mxu0 0.0
        %1706 = vmatprep.subr.mxu0 0.0
        %1707 = vmatpush1.msra.mxu0 0.0
        %1708 = vmatprep.subr.mxu0 0.0
        %1709 = vmatpush1.msra.mxu0 0.0
        %1710 = vmatprep.subr.mxu0 0.0
        %1711 = vmatpush1.msra.mxu0 0.0
        %1712 = vmatprep.subr.mxu0 0.0
        %1713 = vmatpush1.msra.mxu0 0.0
        %1714 = vmatprep.subr.mxu0 0.0
        %1715 = vmatpush1.msra.mxu0 0.0
        %1716 = vmatprep.subr.mxu0 0.0
        %1717 = vmatpush1.msra.mxu0 0.0
        %1718 = vmatprep.subr.mxu0 0.0
        %1719 = vmatpush1.msra.mxu0 0.0
        %1720 = vmatprep.subr.mxu0 0.0
        %1721 = vmatpush1.msra.mxu0 0.0
        %1722 = vmatprep.subr.mxu0 0.0
        %1723 = vmatpush1.msra.mxu0 0.0
        %1724 = vmatprep.subr.mxu0 0.0
        %1725 = vmatpush1.msra.mxu0 0.0
        %1726 = vmatprep.mubr.f32.mxu0 0.0
        %1727 = vmatmul.mubr.f32.gmra.mrb[0].mxu0 %v1660
        %v1728 = vpop.f32.mrb[0].mxu0
        %v1729 = vadd.f32 0.0, %v1728
        %v1730 = vpop.f32.mrb[0].mxu0
        %1731 = vdwg.mxu0
        %1732 = vrot.lane.b32.xlu0 %v472, 64
        %v1733 = vpop.permute.xlu0 %1732
        %v1736 = vsel %vm475, %v1199, 0
        %1738 = vmatprep.subr.mxu0 0.0
        %1739 = vmatpush1.msra.mxu0 %v1733
        %1740 = vmatprep.subr.mxu0 0.0
        %1741 = vmatpush1.msra.mxu0 0.0
        %1742 = vmatprep.subr.mxu0 0.0
        %1743 = vmatpush1.msra.mxu0 0.0
        %1744 = vmatprep.subr.mxu0 0.0
        %1745 = vmatpush1.msra.mxu0 0.0
        %1746 = vmatprep.subr.mxu0 0.0
        %1747 = vmatpush1.msra.mxu0 0.0
        %1748 = vmatprep.subr.mxu0 0.0
        %1749 = vmatpush1.msra.mxu0 0.0
        %1750 = vmatprep.subr.mxu0 0.0
        %1751 = vmatpush1.msra.mxu0 0.0
        %1752 = vmatprep.subr.mxu0 0.0
        %1753 = vmatpush1.msra.mxu0 0.0
        %1754 = vmatprep.subr.mxu0 0.0
        %1755 = vmatpush1.msra.mxu0 0.0
        %1756 = vmatprep.subr.mxu0 0.0
        %1757 = vmatpush1.msra.mxu0 0.0
        %1758 = vmatprep.subr.mxu0 0.0
        %1759 = vmatpush1.msra.mxu0 0.0
        %1760 = vmatprep.subr.mxu0 0.0
        %1761 = vmatpush1.msra.mxu0 0.0
        %1762 = vmatprep.subr.mxu0 0.0
        %1763 = vmatpush1.msra.mxu0 0.0
        %1764 = vmatprep.subr.mxu0 0.0
        %1765 = vmatpush1.msra.mxu0 0.0
        %1766 = vmatprep.subr.mxu0 0.0
        %1767 = vmatpush1.msra.mxu0 0.0
        %1768 = vmatprep.subr.mxu0 0.0
        %1769 = vmatpush1.msra.mxu0 0.0
        %1770 = vmatprep.subr.mxu0 0.0
        %1771 = vmatpush1.msra.mxu0 0.0
        %1772 = vmatprep.subr.mxu0 0.0
        %1773 = vmatpush1.msra.mxu0 0.0
        %1774 = vmatprep.subr.mxu0 0.0
        %1775 = vmatpush1.msra.mxu0 0.0
        %1776 = vmatprep.subr.mxu0 0.0
        %1777 = vmatpush1.msra.mxu0 0.0
        %1778 = vmatprep.subr.mxu0 0.0
        %1779 = vmatpush1.msra.mxu0 0.0
        %1780 = vmatprep.subr.mxu0 0.0
        %1781 = vmatpush1.msra.mxu0 0.0
        %1782 = vmatprep.subr.mxu0 0.0
        %1783 = vmatpush1.msra.mxu0 0.0
        %1784 = vmatprep.subr.mxu0 0.0
        %1785 = vmatpush1.msra.mxu0 0.0
        %1786 = vmatprep.subr.mxu0 0.0
        %1787 = vmatpush1.msra.mxu0 0.0
        %1788 = vmatprep.subr.mxu0 0.0
        %1789 = vmatpush1.msra.mxu0 0.0
        %1790 = vmatprep.subr.mxu0 0.0
        %1791 = vmatpush1.msra.mxu0 0.0
        %1792 = vmatprep.subr.mxu0 0.0
        %1793 = vmatpush1.msra.mxu0 0.0
        %1794 = vmatprep.subr.mxu0 0.0
        %1795 = vmatpush1.msra.mxu0 0.0
        %1796 = vmatprep.subr.mxu0 0.0
        %1797 = vmatpush1.msra.mxu0 0.0
        %1798 = vmatprep.subr.mxu0 0.0
        %1799 = vmatpush1.msra.mxu0 0.0
        %1800 = vmatprep.subr.mxu0 0.0
        %1801 = vmatpush1.msra.mxu0 0.0
        %1802 = vmatprep.mubr.f32.mxu0 0.0
        %1803 = vmatmul.mubr.f32.gmra.mrb[0].mxu0 %v1736
        %v1804 = vpop.f32.mrb[0].mxu0
        %v1805 = vadd.f32 0.0, %v1804
        %v1806 = vpop.f32.mrb[0].mxu0
        %1807 = vdwg.mxu0
        %1810 = vrot.lane.b32.xlu0 %v1425, 8
        %v1811 = vpop.permute.xlu0 %1810
        %1812 = vrot.lane.b32.xlu0 %v1501, 8
        %v1813 = vpop.permute.xlu0 %1812
        %1818 = vrot.lane.b32.xlu0 %v1577, 16
        %v1819 = vpop.permute.xlu0 %1818
        %1820 = vrot.lane.b32.xlu0 %v1653, 16
        %v1821 = vpop.permute.xlu0 %1820
        %1826 = vrot.lane.b32.xlu0 %v1729, 24
        %v1827 = vpop.permute.xlu0 %1826
        %1828 = vrot.lane.b32.xlu0 %v1805, 24
        %v1829 = vpop.permute.xlu0 %1828
        %v1832 = vsel %vm475, %v1273, %v1811
        %v1833 = vsel %vm475, %v1349, %v1813
        %vm1834 = vcmask 130048
        %v1835 = vsel %vm1834, %v1832, %v1819
        %v1836 = vsel %vm1834, %v1833, %v1821
        %vm1837 = vcmask 195584
        %v1838 = vsel %vm1837, %v1835, %v1827
        %v1839 = vsel %vm1837, %v1836, %v1829
        %v1840 = vld [vmem:[%s342] sm:$0xff]
        %v1841 = vld [vmem:[%s342 + $0x8] sm:$0xff]
        %v1842 = vld [vmem:[%s342 + $0x10] sm:$0xff]
        %v1843 = vld [vmem:[%s342 + $0x18] sm:$0xff]
        %v1844 = vlaneseq
        %v1845 = vshrl.u32 %v1844, 7
        %v1846 = vsub.s32 1, %v1845
        %v1847 = vrot.slane %v368, %v1846
        %v1849 = vsel %vm377, %v1838, 0
        %v1852 = vsel %vm377, %v1839, 0
        %1854 = vmatprep.subr.mxu0 0.0
        %1855 = vmatpush1.msra.mxu0 %v1840
        %1856 = vmatprep.subr.mxu0 0.0
        %1857 = vmatpush1.msra.mxu0 %v1841
        %1858 = vmatprep.subr.mxu0 0.0
        %1859 = vmatpush1.msra.mxu0 %v1842
        %1860 = vmatprep.subr.mxu0 0.0
        %1861 = vmatpush1.msra.mxu0 %v1843
        %1862 = vmatprep.subr.mxu0 0.0
        %1863 = vmatpush1.msra.mxu0 0.0
        %1864 = vmatprep.subr.mxu0 0.0
        %1865 = vmatpush1.msra.mxu0 0.0
        %1866 = vmatprep.subr.mxu0 0.0
        %1867 = vmatpush1.msra.mxu0 0.0
        %1868 = vmatprep.subr.mxu0 0.0
        %1869 = vmatpush1.msra.mxu0 0.0
        %1870 = vmatprep.subr.mxu0 0.0
        %1871 = vmatpush1.msra.mxu0 0.0
        %1872 = vmatprep.subr.mxu0 0.0
        %1873 = vmatpush1.msra.mxu0 0.0
        %1874 = vmatprep.subr.mxu0 0.0
        %1875 = vmatpush1.msra.mxu0 0.0
        %1876 = vmatprep.subr.mxu0 0.0
        %1877 = vmatpush1.msra.mxu0 0.0
        %1878 = vmatprep.subr.mxu0 0.0
        %1879 = vmatpush1.msra.mxu0 0.0
        %1880 = vmatprep.subr.mxu0 0.0
        %1881 = vmatpush1.msra.mxu0 0.0
        %1882 = vmatprep.subr.mxu0 0.0
        %1883 = vmatpush1.msra.mxu0 0.0
        %1884 = vmatprep.subr.mxu0 0.0
        %1885 = vmatpush1.msra.mxu0 0.0
        %1886 = vmatprep.subr.mxu0 0.0
        %1887 = vmatpush1.msra.mxu0 0.0
        %1888 = vmatprep.subr.mxu0 0.0
        %1889 = vmatpush1.msra.mxu0 0.0
        %1890 = vmatprep.subr.mxu0 0.0
        %1891 = vmatpush1.msra.mxu0 0.0
        %1892 = vmatprep.subr.mxu0 0.0
        %1893 = vmatpush1.msra.mxu0 0.0
        %1894 = vmatprep.subr.mxu0 0.0
        %1895 = vmatpush1.msra.mxu0 0.0
        %1896 = vmatprep.subr.mxu0 0.0
        %1897 = vmatpush1.msra.mxu0 0.0
        %1898 = vmatprep.subr.mxu0 0.0
        %1899 = vmatpush1.msra.mxu0 0.0
        %1900 = vmatprep.subr.mxu0 0.0
        %1901 = vmatpush1.msra.mxu0 0.0
        %1902 = vmatprep.subr.mxu0 0.0
        %1903 = vmatpush1.msra.mxu0 0.0
        %1904 = vmatprep.subr.mxu0 0.0
        %1905 = vmatpush1.msra.mxu0 0.0
        %1906 = vmatprep.subr.mxu0 0.0
        %1907 = vmatpush1.msra.mxu0 0.0
        %1908 = vmatprep.subr.mxu0 0.0
        %1909 = vmatpush1.msra.mxu0 0.0
        %1910 = vmatprep.subr.mxu0 0.0
        %1911 = vmatpush1.msra.mxu0 0.0
        %1912 = vmatprep.subr.mxu0 0.0
        %1913 = vmatpush1.msra.mxu0 0.0
        %1914 = vmatprep.subr.mxu0 0.0
        %1915 = vmatpush1.msra.mxu0 0.0
        %1916 = vmatprep.subr.mxu0 0.0
        %1917 = vmatpush1.msra.mxu0 0.0
        %1918 = vmatprep.mubr.f32.mxu0 0.0
        %1919 = vmatmul.mubr.f32.gmra.mrb[0].mxu0 %v1849
        %v1920 = vpop.f32.mrb[0].mxu0
        %v1921 = vadd.f32 %v1847, %v1920
        %v1922 = vpop.f32.mrb[0].mxu0
        %1923 = vmatprep.mubr.f32.mxu0 0.0
        %1924 = vmatmul.mubr.f32.gmra.mrb[0].mxu0 %v1852
        %v1925 = vpop.f32.mrb[0].mxu0
        %v1926 = vadd.f32 %v1847, %v1925
        %v1927 = vpop.f32.mrb[0].mxu0
        %1928 = vdwg.mxu0
        %v1929 = vadd.f32 %v366, %v1921
        %v1930 = vadd.f32 %v367, %v1926
        %v1931 = vsel %vm377, %v1929, 0.0
        %1932 = vadd.xlane.f32.xlu0 %v1931
        %v1933 = vpop.xlane.xlu0 %1932
        %v1934 = vsel %vm377, %v1930, 0.0
        %1935 = vadd.xlane.f32.xlu0 %v1934
        %v1936 = vpop.xlane.xlu0 %1935
        %v1937 = vrcp.pop 32.0
        %v1938 = vmul.f32 %v1933, %v1937
        %v1939 = vmul.f32 %v1936, %v1937
        %v1940 = vsub.f32 %v1929, %v1938
        %v1941 = vsub.f32 %v1930, %v1939
        %v1942 = vmul.f32 %v1940, %v1940
        %v1943 = vmul.f32 %v1941, %v1941
        %v1944 = vsel %vm377, %v1942, 0.0
        %1945 = vadd.xlane.f32.xlu0 %v1944
        %v1946 = vpop.xlane.xlu0 %1945
        %v1947 = vsel %vm377, %v1943, 0.0
        %1948 = vadd.xlane.f32.xlu0 %v1947
        %v1949 = vpop.xlane.xlu0 %1948
        %v1950 = vmul.f32 %v1946, %v1937
        %v1951 = vmul.f32 %v1949, %v1937
        %v1952 = vadd.f32 %v1950, 1e-07
        %v1953 = vadd.f32 %v1951, 1e-07
        %v1954 = vrsqrt.pop %v1952
        %v1955 = vrsqrt.pop %v1953
        %v1956 = vmul.f32 %v1940, %v1954
        %v1957 = vmul.f32 %v1941, %v1955
        %v1958 = vlaneseq
        %v1959 = vshrl.u32 %v1958, 7
        %v1960 = vsub.s32 2, %v1959
        %v1961 = vrot.slane %v368, %v1960
        %v1962 = vmul.f32 %v1961, %v1956
        %v1963 = vmul.f32 %v1961, %v1957
        %v1964 = vlaneseq
        %v1965 = vshrl.u32 %v1964, 7
        %v1966 = vsub.s32 3, %v1965
        %v1967 = vrot.slane %v368, %v1966
        %v1968 = vadd.f32 %v1962, %v1967
        %v1969 = vadd.f32 %v1963, %v1967
        %v1970 = vld [vmem:[%s347] sm:$0xff]
        %v1971 = vld [vmem:[%s347 + $0x8] sm:$0xff]
        %v1972 = vld [vmem:[%s347 + $0x10] sm:$0xff]
        %v1973 = vld [vmem:[%s347 + $0x18] sm:$0xff]
        %v1974 = vlaneseq
        %v1975 = vshrl.u32 %v1974, 7
        %v1976 = vsub.s32 4, %v1975
        %v1977 = vrot.slane %v368, %v1976
        %v1979 = vsel %vm377, %v1968, 0
        %v1982 = vsel %vm377, %v1969, 0
        %1984 = vmatprep.subr.mxu0 0.0
        %1985 = vmatpush1.msra.mxu0 %v1970
        %1986 = vmatprep.subr.mxu0 0.0
        %1987 = vmatpush1.msra.mxu0 %v1971
        %1988 = vmatprep.subr.mxu0 0.0
        %1989 = vmatpush1.msra.mxu0 %v1972
        %1990 = vmatprep.subr.mxu0 0.0
        %1991 = vmatpush1.msra.mxu0 %v1973
        %1992 = vmatprep.subr.mxu0 0.0
        %1993 = vmatpush1.msra.mxu0 0.0
        %1994 = vmatprep.subr.mxu0 0.0
        %1995 = vmatpush1.msra.mxu0 0.0
        %1996 = vmatprep.subr.mxu0 0.0
        %1997 = vmatpush1.msra.mxu0 0.0
        %1998 = vmatprep.subr.mxu0 0.0
        %1999 = vmatpush1.msra.mxu0 0.0
        %2000 = vmatprep.subr.mxu0 0.0
        %2001 = vmatpush1.msra.mxu0 0.0
        %2002 = vmatprep.subr.mxu0 0.0
        %2003 = vmatpush1.msra.mxu0 0.0
        %2004 = vmatprep.subr.mxu0 0.0
        %2005 = vmatpush1.msra.mxu0 0.0
        %2006 = vmatprep.subr.mxu0 0.0
        %2007 = vmatpush1.msra.mxu0 0.0
        %2008 = vmatprep.subr.mxu0 0.0
        %2009 = vmatpush1.msra.mxu0 0.0
        %2010 = vmatprep.subr.mxu0 0.0
        %2011 = vmatpush1.msra.mxu0 0.0
        %2012 = vmatprep.subr.mxu0 0.0
        %2013 = vmatpush1.msra.mxu0 0.0
        %2014 = vmatprep.subr.mxu0 0.0
        %2015 = vmatpush1.msra.mxu0 0.0
        %2016 = vmatprep.subr.mxu0 0.0
        %2017 = vmatpush1.msra.mxu0 0.0
        %2018 = vmatprep.subr.mxu0 0.0
        %2019 = vmatpush1.msra.mxu0 0.0
        %2020 = vmatprep.subr.mxu0 0.0
        %2021 = vmatpush1.msra.mxu0 0.0
        %2022 = vmatprep.subr.mxu0 0.0
        %2023 = vmatpush1.msra.mxu0 0.0
        %2024 = vmatprep.subr.mxu0 0.0
        %2025 = vmatpush1.msra.mxu0 0.0
        %2026 = vmatprep.subr.mxu0 0.0
        %2027 = vmatpush1.msra.mxu0 0.0
        %2028 = vmatprep.subr.mxu0 0.0
        %2029 = vmatpush1.msra.mxu0 0.0
        %2030 = vmatprep.subr.mxu0 0.0
        %2031 = vmatpush1.msra.mxu0 0.0
        %2032 = vmatprep.subr.mxu0 0.0
        %2033 = vmatpush1.msra.mxu0 0.0
        %2034 = vmatprep.subr.mxu0 0.0
        %2035 = vmatpush1.msra.mxu0 0.0
        %2036 = vmatprep.subr.mxu0 0.0
        %2037 = vmatpush1.msra.mxu0 0.0
        %2038 = vmatprep.subr.mxu0 0.0
        %2039 = vmatpush1.msra.mxu0 0.0
        %2040 = vmatprep.subr.mxu0 0.0
        %2041 = vmatpush1.msra.mxu0 0.0
        %2042 = vmatprep.subr.mxu0 0.0
        %2043 = vmatpush1.msra.mxu0 0.0
        %2044 = vmatprep.subr.mxu0 0.0
        %2045 = vmatpush1.msra.mxu0 0.0
        %2046 = vmatprep.subr.mxu0 0.0
        %2047 = vmatpush1.msra.mxu0 0.0
        %2048 = vmatprep.mubr.f32.mxu0 0.0
        %2049 = vmatmul.mubr.f32.gmra.mrb[0].mxu0 %v1979
        %v2050 = vpop.f32.mrb[0].mxu0
        %v2051 = vadd.f32 %v1977, %v2050
        %v2052 = vpop.f32.mrb[0].mxu0
        %2053 = vmatprep.mubr.f32.mxu0 0.0
        %2054 = vmatmul.mubr.f32.gmra.mrb[0].mxu0 %v1982
        %v2055 = vpop.f32.mrb[0].mxu0
        %v2056 = vadd.f32 %v1977, %v2055
        %v2057 = vpop.f32.mrb[0].mxu0
        %2058 = vdwg.mxu0
        %v2059 = vmul.f32 %v2051, 0.5
        %v2060 = vmul.f32 %v2056, 0.5
        %v2061 = vmul.f32 %v2051, 0.70710677
        %v2062 = vmul.f32 %v2056, 0.70710677
        %v2063 = verf.f32.pop %v2061
        %v2064 = verf.f32.pop %v2062
        %v2065 = vadd.f32 %v2063, 1.0
        %v2066 = vadd.f32 %v2064, 1.0
        %v2067 = vmul.f32 %v2059, %v2065
        %v2068 = vmul.f32 %v2060, %v2066
        %v2069 = vld [vmem:[%s352] sm:$0xff]
        %v2070 = vld [vmem:[%s352 + $0x8] sm:$0xff]
        %v2071 = vld [vmem:[%s352 + $0x10] sm:$0xff]
        %v2072 = vld [vmem:[%s352 + $0x18] sm:$0xff]
        %v2073 = vld [vmem:[%s352 + $0x20] sm:$0xff]
        %v2074 = vld [vmem:[%s352 + $0x28] sm:$0xff]
        %v2075 = vld [vmem:[%s352 + $0x30] sm:$0xff]
        %v2076 = vld [vmem:[%s352 + $0x38] sm:$0xff]
        %v2077 = vlaneseq
        %v2078 = vshrl.u32 %v2077, 7
        %v2079 = vsub.s32 5, %v2078
        %v2080 = vrot.slane %v368, %v2079
        %vm2081 = vcmask 523264
        %v2083 = vsel %vm2081, %v2067, 0
        %v2086 = vsel %vm2081, %v2068, 0
        %2088 = vmatprep.subr.mxu0 0.0
        %2089 = vmatpush1.msra.mxu0 %v2069
        %2090 = vmatprep.subr.mxu0 0.0
        %2091 = vmatpush1.msra.mxu0 %v2070
        %2092 = vmatprep.subr.mxu0 0.0
        %2093 = vmatpush1.msra.mxu0 %v2071
        %2094 = vmatprep.subr.mxu0 0.0
        %2095 = vmatpush1.msra.mxu0 %v2072
        %2096 = vmatprep.subr.mxu0 0.0
        %2097 = vmatpush1.msra.mxu0 %v2073
        %2098 = vmatprep.subr.mxu0 0.0
        %2099 = vmatpush1.msra.mxu0 %v2074
        %2100 = vmatprep.subr.mxu0 0.0
        %2101 = vmatpush1.msra.mxu0 %v2075
        %2102 = vmatprep.subr.mxu0 0.0
        %2103 = vmatpush1.msra.mxu0 %v2076
        %2104 = vmatprep.subr.mxu0 0.0
        %2105 = vmatpush1.msra.mxu0 0.0
        %2106 = vmatprep.subr.mxu0 0.0
        %2107 = vmatpush1.msra.mxu0 0.0
        %2108 = vmatprep.subr.mxu0 0.0
        %2109 = vmatpush1.msra.mxu0 0.0
        %2110 = vmatprep.subr.mxu0 0.0
        %2111 = vmatpush1.msra.mxu0 0.0
        %2112 = vmatprep.subr.mxu0 0.0
        %2113 = vmatpush1.msra.mxu0 0.0
        %2114 = vmatprep.subr.mxu0 0.0
        %2115 = vmatpush1.msra.mxu0 0.0
        %2116 = vmatprep.subr.mxu0 0.0
        %2117 = vmatpush1.msra.mxu0 0.0
        %2118 = vmatprep.subr.mxu0 0.0
        %2119 = vmatpush1.msra.mxu0 0.0
        %2120 = vmatprep.subr.mxu0 0.0
        %2121 = vmatpush1.msra.mxu0 0.0
        %2122 = vmatprep.subr.mxu0 0.0
        %2123 = vmatpush1.msra.mxu0 0.0
        %2124 = vmatprep.subr.mxu0 0.0
        %2125 = vmatpush1.msra.mxu0 0.0
        %2126 = vmatprep.subr.mxu0 0.0
        %2127 = vmatpush1.msra.mxu0 0.0
        %2128 = vmatprep.subr.mxu0 0.0
        %2129 = vmatpush1.msra.mxu0 0.0
        %2130 = vmatprep.subr.mxu0 0.0
        %2131 = vmatpush1.msra.mxu0 0.0
        %2132 = vmatprep.subr.mxu0 0.0
        %2133 = vmatpush1.msra.mxu0 0.0
        %2134 = vmatprep.subr.mxu0 0.0
        %2135 = vmatpush1.msra.mxu0 0.0
        %2136 = vmatprep.subr.mxu0 0.0
        %2137 = vmatpush1.msra.mxu0 0.0
        %2138 = vmatprep.subr.mxu0 0.0
        %2139 = vmatpush1.msra.mxu0 0.0
        %2140 = vmatprep.subr.mxu0 0.0
        %2141 = vmatpush1.msra.mxu0 0.0
        %2142 = vmatprep.subr.mxu0 0.0
        %2143 = vmatpush1.msra.mxu0 0.0
        %2144 = vmatprep.subr.mxu0 0.0
        %2145 = vmatpush1.msra.mxu0 0.0
        %2146 = vmatprep.subr.mxu0 0.0
        %2147 = vmatpush1.msra.mxu0 0.0
        %2148 = vmatprep.subr.mxu0 0.0
        %2149 = vmatpush1.msra.mxu0 0.0
        %2150 = vmatprep.subr.mxu0 0.0
        %2151 = vmatpush1.msra.mxu0 0.0
        %2152 = vmatprep.mubr.f32.mxu0 0.0
        %2153 = vmatmul.mubr.f32.gmra.mrb[0].mxu0 %v2083
        %v2154 = vpop.f32.mrb[0].mxu0
        %v2155 = vadd.f32 %v2080, %v2154
        %v2156 = vpop.f32.mrb[0].mxu0
        %2157 = vmatprep.mubr.f32.mxu0 0.0
        %2158 = vmatmul.mubr.f32.gmra.mrb[0].mxu0 %v2086
        %v2159 = vpop.f32.mrb[0].mxu0
        %v2160 = vadd.f32 %v2080, %v2159
        %v2161 = vpop.f32.mrb[0].mxu0
        %2162 = vdwg.mxu0
        %v2163 = vadd.f32 %v1968, %v2155
        %v2164 = vadd.f32 %v1969, %v2160
        %v2165 = vsel %vm377, %v2163, 0.0
        %2166 = vadd.xlane.f32.xlu0 %v2165
        %v2167 = vpop.xlane.xlu0 %2166
        %v2168 = vsel %vm377, %v2164, 0.0
        %2169 = vadd.xlane.f32.xlu0 %v2168
        %v2170 = vpop.xlane.xlu0 %2169
        %v2171 = vmul.f32 %v2167, %v1937
        %v2172 = vmul.f32 %v2170, %v1937
        %v2173 = vsub.f32 %v2163, %v2171
        %v2174 = vsub.f32 %v2164, %v2172
        %v2175 = vmul.f32 %v2173, %v2173
        %v2176 = vmul.f32 %v2174, %v2174
        %v2177 = vsel %vm377, %v2175, 0.0
        %2178 = vadd.xlane.f32.xlu0 %v2177
        %v2179 = vpop.xlane.xlu0 %2178
        %v2180 = vsel %vm377, %v2176, 0.0
        %2181 = vadd.xlane.f32.xlu0 %v2180
        %v2182 = vpop.xlane.xlu0 %2181
        %v2183 = vmul.f32 %v2179, %v1937
        %v2184 = vmul.f32 %v2182, %v1937
        %v2185 = vadd.f32 %v2183, 1e-07
        %v2186 = vadd.f32 %v2184, 1e-07
        %v2187 = vrsqrt.pop %v2185
        %v2188 = vrsqrt.pop %v2186
        %v2189 = vmul.f32 %v2173, %v2187
        %v2190 = vmul.f32 %v2174, %v2188
        %v2191 = vlaneseq
        %v2192 = vshrl.u32 %v2191, 7
        %v2193 = vsub.s32 6, %v2192
        %v2194 = vrot.slane %v368, %v2193
        %v2195 = vmul.f32 %v2194, %v2189
        %v2196 = vmul.f32 %v2194, %v2190
        %v2197 = vlaneseq
        %v2198 = vshrl.u32 %v2197, 7
        %v2199 = vsub.s32 7, %v2198
        %v2200 = vrot.slane %v368, %v2199
        %v2201 = vadd.f32 %v2195, %v2200
        %v2202 = vadd.f32 %v2196, %v2200
        %2203 = vst.msk [vmem:[#allocation5] sm:$0xff] %vm377, %v2201
        %2204 = vst.msk [vmem:[#allocation5 + $0x8] sm:$0xff] %vm377, %v2202
        // Predicated region
        $region57: #{_bert_encoder_impl.1} parent=47 // pred_check
          %p2205 = pneg %p205
        $region58: #{_bert_encoder_impl.1} parent=47 // pred_check_branch
          %2207 = sbr.rel (%p2205) target = $region60
        $region59: #{_bert_encoder_impl.1} parent=47 // pred_region
          %s2209 = ssub.s32 256, 256
          %2210 = vsyncadd [#allocation4], %s2209
          %s2211 = sshll.u32 [#allocation5], 4
          %s2212 = int_to_ptr.vmem [resolvable:$true] %s2211
          %2217 = dma.vmem_to_hbm [thread:$0]  %s2212, 256, %s7, [#allocation4], 128, 128, 8
        $region60: #{_bert_encoder_impl.1} parent=47 // pred_fallthru
          _
        // Predicated region
        $region61: #{_bert_encoder_impl.1} parent=47 // pred_check
          %p2218 = pneg %p205
        $region62: #{_bert_encoder_impl.1} parent=47 // pred_check_branch
          %2220 = sbr.rel (%p2218) target = $region64
        $region63: #{_bert_encoder_impl.1} parent=47 // pred_region
          %2221 = dma.done [#allocation4], 256
        $region64: #{_bert_encoder_impl.1} parent=47 // pred_fallthru
          _
      $region48: #{_bert_encoder_impl.1} parent=5 // pred_fallthru
        _
      %p2222 = scmp.le.s32.totalorder 2, %s15
      // Predicated region
      $region65: #{_bert_encoder_impl.1} parent=5 // pred_check
        %p2223 = pneg %p2222
      $region66: #{_bert_encoder_impl.1} parent=5 // pred_check_branch
        %2225 = sbr.rel (%p2223) target = $region68
      $region67: #{_bert_encoder_impl.1} parent=5 // pred_region
        %s2226 = ssub.s32 %s15, 2
      $region68: #{_bert_encoder_impl.1} parent=5 // pred_fallthru
        _
    $region6: #{_bert_encoder_impl.1} parent=1 // loop_footer
      %s19 = sadd.s32 1, %s15
    $region7: #{_bert_encoder_impl.1} parent=1 // loop_footer_branch
      %14 = sbr.rel target = $region3
    $region8: #{_bert_encoder_impl.1} parent=1 // loop_exit
      _
    %2227 = vsyncpa [#allocation3], 1
    %s2228 = scalar_lea.sflag [#allocation3], 1
    %2229 = vsyncpa %s2228, 1
    %2230 = vsyncpa [#allocation4], 1
    %s2231 = scalar_lea.sflag [#allocation4], 1
    %2232 = vsyncpa %s2231, 1

</llo_original>
